<compile_context>
chip_gen: v7x
topology: tpu7x:2x2x1
jax: 0.10.0
libtpu: 0.0.40
codegen_flags: <defaults>
</compile_context>

<pallas_src>
import jax
import jax.numpy as jnp
from jax import lax
from jax.experimental import pallas as pl
from jax.experimental.pallas import tpu as pltpu


def _round_up(x: int, m: int) -> int:
    return ((x + m - 1) // m) * m


def _choose_batch_tile(B: int, target: int = 8) -> int:
    """Batch elements processed per grid step.

    Small batches run in a single step (full-size blocks are always legal and
    there is no per-step overhead to amortize).  Larger batches use an
    8-aligned tile so the (TB*R, D) / (TB*L, D1) / (TB, P) blocks satisfy the
    TPU sublane alignment rules.
    """
    if B <= max(target, 8):
        return B
    return _round_up(target, 8)


def _softmax_last(x):
    """Row softmax.  exp on the EUP; normalization via the EUP approximate
    reciprocal plus one Newton-Raphson step (divide leaves the VALU, ~f32 exact)."""
    m = jnp.max(x, axis=-1, keepdims=True)
    e = jnp.exp(x - m)
    s = jnp.sum(e, axis=-1, keepdims=True)
    r = pl.reciprocal(s, approx=True)
    r = r * (2.0 - s * r)           # one NR refinement of the approx reciprocal
    return e * r


def parallel_co_attention(params, V, Q_in, Q_lengths=None, batch_tile: int = 8):
    """Forward pass of ParallelCoAttentionNetwork.

    params = (W_b, W_v, W_q, w_hv, w_hq)
    V    : [B, D, R]    image features
    Q_in : [B, D1, L]   question features (effective layout used by the module)
    Q_lengths: accepted for API parity.  The reference module computes
      `masked_a_q` from it but never returns it, so it cannot affect outputs
      and is omitted here.
    """
    W_b, W_v, W_q, w_hv, w_hq = params
    B, D, R = V.shape
    _, D1, L = Q_in.shape
    K = W_v.shape[0]

    TB = _choose_batch_tile(B, batch_tile)
    B_pad = _round_up(B, TB)
    nb = B_pad // TB
    if B_pad != B:                     # zero-pad batch; padded rows sliced off below
        V = jnp.pad(V, ((0, B_pad - B), (0, 0), (0, 0)))
        Q_in = jnp.pad(Q_in, ((0, B_pad - B), (0, 0), (0, 0)))

    f32 = jnp.float32
    # Token-major 2-D slabs: row index = (batch, region/word), columns = features.
    Vt = jnp.transpose(V, (0, 2, 1)).reshape(B_pad * R, D).astype(f32)       # [B*R, D]
    Qp = jnp.transpose(Q_in, (0, 2, 1)).reshape(B_pad * L, D1).astype(f32)   # [B*L, D1]

    # Lane-dense packed output: [ a_v(R) | a_q(L) | v(D) | q(D1) | zero pad ] per row.
    used = R + L + D + D1
    P = _round_up(used, 128)
    o_av, o_aq, o_v, o_q = 0, R, R + L, R + L + D

    # "rhs transposed" contraction: contract the trailing axes of both operands.
    NT = (((1,), (1,)), ((), ()))

    def kernel(wb_ref, wv_ref, wq_ref, whv_ref, whq_ref, vt_ref, qp_ref, out_ref):
        W_b_ = wb_ref[...]       # [D1, D]
        W_v_ = wv_ref[...]       # [K, D]
        W_q_ = wq_ref[...]       # [K, D1]
        w_hv_ = whv_ref[...]     # [K, 1]
        w_hq_ = whq_ref[...]     # [K, 1]
        vt = vt_ref[...]         # [TB*R, D]
        qp = qp_ref[...]         # [TB*L, D1]

        # ---- hoisted weight x data matmuls for the whole batch tile (MXU) ----
        # column t = b*R + r  (resp. b*L + l) of the results below belongs to
        # batch element b; no per-element tiny matmuls for these.
        WbV = lax.dot_general(W_b_, vt, NT, preferred_element_type=f32)   # [D1, TB*R]
        WvV = lax.dot_general(W_v_, vt, NT, preferred_element_type=f32)   # [K,  TB*R]
        WqQ = lax.dot_general(W_q_, qp, NT, preferred_element_type=f32)   # [K,  TB*L]

        if P > used:  # deterministic padding lanes of the packed output
            out_ref[:, used:P] = jnp.zeros((TB, P - used), f32)

        # ---- per-element part (inherently batched): short static unroll ----
        for b in range(TB):
            sR = slice(b * R, (b + 1) * R)
            sL = slice(b * L, (b + 1) * L)
            Vb = vt[sR, :]        # [R, D]   == V_b^T
            Qb = qp[sL, :]        # [L, D1]  == module's permuted Q_b
            WbVb = WbV[:, sR]     # [D1, R]  == W_b @ V_b
            WvVb = WvV[:, sR]     # [K, R]   == W_v @ V_b
            WqQb = WqQ[:, sL]     # [K, L]   == W_q @ Q_b(perm)^T

            Cb = jnp.dot(Qb, WbVb, preferred_element_type=f32)             # [L, R]
            Hv = jnp.tanh(WvVb + jnp.dot(WqQb, Cb,
                                         preferred_element_type=f32))      # [K, R]
            # (W_v V) @ C^T without materializing C^T:
            Hq = jnp.tanh(WqQb + lax.dot_general(WvVb, Cb, NT,
                                                 preferred_element_type=f32))  # [K, L]

            # w_h^T H: VPU broadcast-multiply + sublane reduce (no 1xK matmul,
            # no transpose of w_h).
            a_v = _softmax_last(jnp.sum(w_hv_ * Hv, axis=0, keepdims=True))  # [1, R]
            a_q = _softmax_last(jnp.sum(w_hq_ * Hq, axis=0, keepdims=True))  # [1, L]

            v_b = jnp.dot(a_v, Vb, preferred_element_type=f32)   # [1, D]  = a_v V^T
            q_b = jnp.dot(a_q, Qb, preferred_element_type=f32)   # [1, D1] = a_q Q(perm)

            # Pack into the lane-dense output row (single [TB, P] block DMA'd back).
            out_ref[b:b + 1, o_av:o_av + R] = a_v
            out_ref[b:b + 1, o_aq:o_aq + L] = a_q
            out_ref[b:b + 1, o_v:o_v + D] = v_b
            out_ref[b:b + 1, o_q:o_q + D1] = q_b

    grid_spec = pltpu.PrefetchScalarGridSpec(
        num_scalar_prefetch=0,
        grid=(nb,),
        in_specs=[
            # Weights: grid-invariant blocks, kept resident in VMEM.
            pl.BlockSpec((D1, D), lambda i: (0, 0)),
            pl.BlockSpec((K, D), lambda i: (0, 0)),
            pl.BlockSpec((K, D1), lambda i: (0, 0)),
            pl.BlockSpec((K, 1), lambda i: (0, 0)),
            pl.BlockSpec((K, 1), lambda i: (0, 0)),
            # Batch-tiled token-major activations.
            pl.BlockSpec((TB * R, D), lambda i: (i, 0)),
            pl.BlockSpec((TB * L, D1), lambda i: (i, 0)),
        ],
        out_specs=pl.BlockSpec((TB, P), lambda i: (i, 0)),
    )

    packed = pl.pallas_call(
        kernel,
        grid_spec=grid_spec,
        out_shape=jax.ShapeDtypeStruct((B_pad, P), f32),
        compiler_params=pltpu.CompilerParams(
            dimension_semantics=("parallel",)),   # >=2 tiles -> both v7x TCs
    )(W_b.astype(f32), W_v.astype(f32), W_q.astype(f32),
      w_hv.astype(f32), w_hq.astype(f32), Vt, Qp)

    packed = packed[:B]
    a_v = packed[:, None, o_av:o_av + R]     # [B, 1, R]
    a_q = packed[:, None, o_aq:o_aq + L]     # [B, 1, L]
    v = packed[:, o_v:o_v + D]               # [B, D]
    q = packed[:, o_q:o_q + D1]              # [B, D1]
    return a_v, a_q, v, q


def _reference(params, V, Q_in):
    """Pure-JAX replica of the PyTorch forward (for correctness checking)."""
    W_b, W_v, W_q, w_hv, w_hq = params
    Qp = jnp.transpose(Q_in, (0, 2, 1))                      # [B, L, D1]
    WbV = jnp.einsum('ij,bjr->bir', W_b, V)                  # [B, D1, R]
    C = jnp.matmul(Qp, WbV)                                  # [B, L, R]
    WvV = jnp.einsum('kj,bjr->bkr', W_v, V)                  # [B, K, R]
    WqQt = jnp.einsum('kj,blj->bkl', W_q, Qp)                # [B, K, L]
    H_v = jnp.tanh(WvV + jnp.matmul(WqQt, C))                # [B, K, R]
    H_q = jnp.tanh(WqQt + jnp.matmul(WvV, jnp.transpose(C, (0, 2, 1))))
    a_v = jax.nn.softmax(jnp.einsum('k,bkr->br', w_hv[:, 0], H_v), axis=-1)[:, None, :]
    a_q = jax.nn.softmax(jnp.einsum('k,bkl->bl', w_hq[:, 0], H_q), axis=-1)[:, None, :]
    v = jnp.matmul(a_v, jnp.transpose(V, (0, 2, 1)))[:, 0, :]
    q = jnp.matmul(a_q, Qp)[:, 0, :]
    return a_v, a_q, v, q


if __name__ == "__main__":
    B, D, D1, K, R, L = 2, 32, 24, 16, 16, 8

    key = jax.random.PRNGKey(0)
    k1, k2, k3, k4, k5, k6, k7 = jax.random.split(key, 7)

    # Deterministic "torch.randn"-style parameter init.
    W_b = jax.random.normal(k1, (D1, D), dtype=jnp.float32)
    W_v = jax.random.normal(k2, (K, D), dtype=jnp.float32)
    W_q = jax.random.normal(k3, (K, D1), dtype=jnp.float32)
    w_hv = jax.random.normal(k4, (K, 1), dtype=jnp.float32)
    w_hq = jax.random.normal(k5, (K, 1), dtype=jnp.float32)
    params = (W_b, W_v, W_q, w_hv, w_hq)

    V = jax.random.normal(k6, (B, D, R), dtype=jnp.float32)
    Q_in = jax.random.normal(k7, (B, D1, L), dtype=jnp.float32)
    Q_lengths = jnp.array([L, L - 3], dtype=jnp.int32)  # feeds only the unused masked_a_q

    outs = parallel_co_attention(params, V, Q_in, Q_lengths)
    outs = jax.block_until_ready(outs)

    refs = _reference(params, V, Q_in)
    # 1e-3 slack accommodates the EUP approximate reciprocal (+ one NR step) in
    # the softmax normalization and matmul re-association from batch-hoisting;
    # real bugs produce errors orders of magnitude larger.
    for o, r in zip(outs, refs):
        assert o.shape == r.shape, (o.shape, r.shape)
        err = float(jnp.max(jnp.abs(o - r)))
        assert jnp.allclose(o, r, atol=1e-3, rtol=1e-3), err

    print("KERNEL_OK")
</pallas_src>

<mosaic_0001>
module attributes {stable_mosaic.version = 11 : i64} {
  func.func @kernel(%arg0: i32, %arg1: memref<24x32xf32, #tpu.memory_space<vmem>>, %arg2: memref<16x32xf32, #tpu.memory_space<vmem>>, %arg3: memref<16x24xf32, #tpu.memory_space<vmem>>, %arg4: memref<16x1xf32, #tpu.memory_space<vmem>>, %arg5: memref<16x1xf32, #tpu.memory_space<vmem>>, %arg6: memref<32x32xf32, #tpu.memory_space<vmem>>, %arg7: memref<16x24xf32, #tpu.memory_space<vmem>>, %arg8: memref<2x128xf32, #tpu.memory_space<vmem>>) attributes {dimension_semantics = [#tpu.dimension_semantics<parallel>], iteration_bounds = array<i64: 1>, scalar_prefetch = 0 : i64, scratch_operands = 0 : i64, tpu.core_type = #tpu.core_type<tc>, window_params = [{pipeline_mode = #tpu.pipeline_mode<synchronous>, transform_indices = @transform_0, window_bounds = array<i64: 24, 32>}, {pipeline_mode = #tpu.pipeline_mode<synchronous>, transform_indices = @transform_1, window_bounds = array<i64: 16, 32>}, {pipeline_mode = #tpu.pipeline_mode<synchronous>, transform_indices = @transform_2, window_bounds = array<i64: 16, 24>}, {pipeline_mode = #tpu.pipeline_mode<synchronous>, transform_indices = @transform_3, window_bounds = array<i64: 16, 1>}, {pipeline_mode = #tpu.pipeline_mode<synchronous>, transform_indices = @transform_4, window_bounds = array<i64: 16, 1>}, {transform_indices = @transform_5, window_bounds = array<i64: 32, 32>}, {transform_indices = @transform_6, window_bounds = array<i64: 16, 24>}, {transform_indices = @transform_7, window_bounds = array<i64: 2, 128>}]} {
    %c0 = arith.constant 0 : index
    %c0_0 = arith.constant 0 : index
    %0 = vector.load %arg1[%c0, %c0_0] : memref<24x32xf32, #tpu.memory_space<vmem>>, vector<24x32xf32>
    %c0_1 = arith.constant 0 : index
    %c0_2 = arith.constant 0 : index
    %1 = vector.load %arg2[%c0_1, %c0_2] : memref<16x32xf32, #tpu.memory_space<vmem>>, vector<16x32xf32>
    %c0_3 = arith.constant 0 : index
    %c0_4 = arith.constant 0 : index
    %2 = vector.load %arg3[%c0_3, %c0_4] : memref<16x24xf32, #tpu.memory_space<vmem>>, vector<16x24xf32>
    %c0_5 = arith.constant 0 : index
    %c0_6 = arith.constant 0 : index
    %3 = vector.load %arg4[%c0_5, %c0_6] : memref<16x1xf32, #tpu.memory_space<vmem>>, vector<16x1xf32>
    %c0_7 = arith.constant 0 : index
    %c0_8 = arith.constant 0 : index
    %4 = vector.load %arg5[%c0_7, %c0_8] : memref<16x1xf32, #tpu.memory_space<vmem>>, vector<16x1xf32>
    %c0_9 = arith.constant 0 : index
    %c0_10 = arith.constant 0 : index
    %5 = vector.load %arg6[%c0_9, %c0_10] : memref<32x32xf32, #tpu.memory_space<vmem>>, vector<32x32xf32>
    %c0_11 = arith.constant 0 : index
    %c0_12 = arith.constant 0 : index
    %6 = vector.load %arg7[%c0_11, %c0_12] : memref<16x24xf32, #tpu.memory_space<vmem>>, vector<16x24xf32>
    %cst = arith.constant dense<0.000000e+00> : vector<24x32xf32>
    %7 = tpu.matmul %0, %5, %cst {dimension_numbers = #tpu.dot_dimension_numbers<[1], [1], [0], [0], [0, 0, 1, 0], [], []>} : vector<24x32xf32>, vector<32x32xf32>, vector<24x32xf32> -> vector<24x32xf32>
    %cst_13 = arith.constant dense<0.000000e+00> : vector<16x32xf32>
    %8 = tpu.matmul %1, %5, %cst_13 {dimension_numbers = #tpu.dot_dimension_numbers<[1], [1], [0], [0], [0, 0, 1, 0], [], []>} : vector<16x32xf32>, vector<32x32xf32>, vector<16x32xf32> -> vector<16x32xf32>
    %cst_14 = arith.constant dense<0.000000e+00> : vector<16x16xf32>
    %9 = tpu.matmul %2, %6, %cst_14 {dimension_numbers = #tpu.dot_dimension_numbers<[1], [1], [0], [0], [0, 0, 1, 0], [], []>} : vector<16x24xf32>, vector<16x24xf32>, vector<16x16xf32> -> vector<16x16xf32>
    %cst_15 = arith.constant 0.000000e+00 : f32
    %10 = vector.broadcast %cst_15 : f32 to vector<2x48xf32>
    %c0_16 = arith.constant 0 : index
    %c80 = arith.constant 80 : index
    %11 = vector.load %arg8[%c0_16, %c80] : memref<2x128xf32, #tpu.memory_space<vmem>>, vector<2x48xf32>
    tpu.vector_store %arg8[%c0_16, %c80], %10 {strides = array<i32>} : memref<2x128xf32, #tpu.memory_space<vmem>>, vector<2x48xf32>,
    %12 = vector.extract_strided_slice %5 {offsets = [0, 0], sizes = [16, 32], strides = [1, 1]} : vector<32x32xf32> to vector<16x32xf32>
    %13 = vector.extract_strided_slice %6 {offsets = [0, 0], sizes = [8, 24], strides = [1, 1]} : vector<16x24xf32> to vector<8x24xf32>
    %14 = vector.extract_strided_slice %7 {offsets = [0, 0], sizes = [24, 16], strides = [1, 1]} : vector<24x32xf32> to vector<24x16xf32>
    %15 = vector.extract_strided_slice %8 {offsets = [0, 0], sizes = [16, 16], strides = [1, 1]} : vector<16x32xf32> to vector<16x16xf32>
    %16 = vector.extract_strided_slice %9 {offsets = [0, 0], sizes = [16, 8], strides = [1, 1]} : vector<16x16xf32> to vector<16x8xf32>
    %cst_17 = arith.constant dense<0.000000e+00> : vector<8x16xf32>
    %17 = tpu.matmul %13, %14, %cst_17 {dimension_numbers = #tpu.dot_dimension_numbers<[1], [0], [0], [1], [0, 0, 1, 1], [], []>} : vector<8x24xf32>, vector<24x16xf32>, vector<8x16xf32> -> vector<8x16xf32>
    %cst_18 = arith.constant dense<0.000000e+00> : vector<16x16xf32>
    %18 = tpu.matmul %16, %17, %cst_18 {dimension_numbers = #tpu.dot_dimension_numbers<[1], [0], [0], [1], [0, 0, 1, 1], [], []>} : vector<16x8xf32>, vector<8x16xf32>, vector<16x16xf32> -> vector<16x16xf32>
    %19 = arith.addf %15, %18 : vector<16x16xf32>
    %20 = math.tanh %19 : vector<16x16xf32>
    %cst_19 = arith.constant dense<0.000000e+00> : vector<16x8xf32>
    %21 = tpu.matmul %15, %17, %cst_19 {dimension_numbers = #tpu.dot_dimension_numbers<[1], [1], [0], [0], [0, 0, 1, 0], [], []>} : vector<16x16xf32>, vector<8x16xf32>, vector<16x8xf32> -> vector<16x8xf32>
    %22 = arith.addf %16, %21 : vector<16x8xf32>
    %23 = math.tanh %22 : vector<16x8xf32>
    %24 = vector.broadcast %3 : vector<16x1xf32> to vector<16x16xf32>
    %25 = arith.mulf %24, %20 : vector<16x16xf32>
    %cst_20 = arith.constant dense<0.000000e+00> : vector<16xf32>
    %26 = vector.multi_reduction <add>, %25, %cst_20 [0] : vector<16x16xf32> to vector<16xf32>
    %27 = vector.shape_cast %26 : vector<16xf32> to vector<1x16xf32>
    %cst_21 = arith.constant dense<0xFF800000> : vector<1xf32>
    %28 = vector.multi_reduction <maximumf>, %27, %cst_21 [1] : vector<1x16xf32> to vector<1xf32>
    %29 = vector.shape_cast %28 : vector<1xf32> to vector<1x1xf32>
    %30 = vector.broadcast %29 : vector<1x1xf32> to vector<1x16xf32>
    %31 = arith.subf %27, %30 : vector<1x16xf32>
    %32 = math.exp %31 : vector<1x16xf32>
    %cst_22 = arith.constant dense<0.000000e+00> : vector<1xf32>
    %33 = vector.multi_reduction <add>, %32, %cst_22 [1] : vector<1x16xf32> to vector<1xf32>
    %34 = vector.shape_cast %33 : vector<1xf32> to vector<1x1xf32>
    %35 = tpu.reciprocal %34 {approx = true} : vector<1x1xf32> -> vector<1x1xf32>
    %36 = arith.mulf %34, %35 : vector<1x1xf32>
    %cst_23 = arith.constant 2.000000e+00 : f32
    %37 = vector.broadcast %cst_23 : f32 to vector<1x1xf32>
    %38 = arith.subf %37, %36 : vector<1x1xf32>
    %39 = arith.mulf %35, %38 : vector<1x1xf32>
    %40 = vector.broadcast %39 : vector<1x1xf32> to vector<1x16xf32>
    %41 = arith.mulf %32, %40 : vector<1x16xf32>
    %42 = vector.broadcast %4 : vector<16x1xf32> to vector<16x8xf32>
    %43 = arith.mulf %42, %23 : vector<16x8xf32>
    %cst_24 = arith.constant dense<0.000000e+00> : vector<8xf32>
    %44 = vector.multi_reduction <add>, %43, %cst_24 [0] : vector<16x8xf32> to vector<8xf32>
    %45 = vector.shape_cast %44 : vector<8xf32> to vector<1x8xf32>
    %cst_25 = arith.constant dense<0xFF800000> : vector<1xf32>
    %46 = vector.multi_reduction <maximumf>, %45, %cst_25 [1] : vector<1x8xf32> to vector<1xf32>
    %47 = vector.shape_cast %46 : vector<1xf32> to vector<1x1xf32>
    %48 = vector.broadcast %47 : vector<1x1xf32> to vector<1x8xf32>
    %49 = arith.subf %45, %48 : vector<1x8xf32>
    %50 = math.exp %49 : vector<1x8xf32>
    %cst_26 = arith.constant dense<0.000000e+00> : vector<1xf32>
    %51 = vector.multi_reduction <add>, %50, %cst_26 [1] : vector<1x8xf32> to vector<1xf32>
    %52 = vector.shape_cast %51 : vector<1xf32> to vector<1x1xf32>
    %53 = tpu.reciprocal %52 {approx = true} : vector<1x1xf32> -> vector<1x1xf32>
    %54 = arith.mulf %52, %53 : vector<1x1xf32>
    %cst_27 = arith.constant 2.000000e+00 : f32
    %55 = vector.broadcast %cst_27 : f32 to vector<1x1xf32>
    %56 = arith.subf %55, %54 : vector<1x1xf32>
    %57 = arith.mulf %53, %56 : vector<1x1xf32>
    %58 = vector.broadcast %57 : vector<1x1xf32> to vector<1x8xf32>
    %59 = arith.mulf %50, %58 : vector<1x8xf32>
    %cst_28 = arith.constant dense<0.000000e+00> : vector<1x32xf32>
    %60 = tpu.matmul %41, %12, %cst_28 {dimension_numbers = #tpu.dot_dimension_numbers<[1], [0], [0], [1], [0, 0, 1, 1], [], []>} : vector<1x16xf32>, vector<16x32xf32>, vector<1x32xf32> -> vector<1x32xf32>
    %cst_29 = arith.constant dense<0.000000e+00> : vector<1x24xf32>
    %61 = tpu.matmul %59, %13, %cst_29 {dimension_numbers = #tpu.dot_dimension_numbers<[1], [0], [0], [1], [0, 0, 1, 1], [], []>} : vector<1x8xf32>, vector<8x24xf32>, vector<1x24xf32> -> vector<1x24xf32>
    %c0_30 = arith.constant 0 : index
    %c0_31 = arith.constant 0 : index
    %62 = vector.load %arg8[%c0_30, %c0_31] : memref<2x128xf32, #tpu.memory_space<vmem>>, vector<1x16xf32>
    tpu.vector_store %arg8[%c0_30, %c0_31], %41 {strides = array<i32>} : memref<2x128xf32, #tpu.memory_space<vmem>>, vector<1x16xf32>,
    %c0_32 = arith.constant 0 : index
    %c16 = arith.constant 16 : index
    %63 = vector.load %arg8[%c0_32, %c16] : memref<2x128xf32, #tpu.memory_space<vmem>>, vector<1x8xf32>
    tpu.vector_store %arg8[%c0_32, %c16], %59 {strides = array<i32>} : memref<2x128xf32, #tpu.memory_space<vmem>>, vector<1x8xf32>,
    %c0_33 = arith.constant 0 : index
    %c24 = arith.constant 24 : index
    %64 = vector.load %arg8[%c0_33, %c24] : memref<2x128xf32, #tpu.memory_space<vmem>>, vector<1x32xf32>
    tpu.vector_store %arg8[%c0_33, %c24], %60 {strides = array<i32>} : memref<2x128xf32, #tpu.memory_space<vmem>>, vector<1x32xf32>,
    %c0_34 = arith.constant 0 : index
    %c56 = arith.constant 56 : index
    %65 = vector.load %arg8[%c0_34, %c56] : memref<2x128xf32, #tpu.memory_space<vmem>>, vector<1x24xf32>
    tpu.vector_store %arg8[%c0_34, %c56], %61 {strides = array<i32>} : memref<2x128xf32, #tpu.memory_space<vmem>>, vector<1x24xf32>,
    %66 = vector.extract_strided_slice %5 {offsets = [16, 0], sizes = [16, 32], strides = [1, 1]} : vector<32x32xf32> to vector<16x32xf32>
    %67 = vector.extract_strided_slice %6 {offsets = [8, 0], sizes = [8, 24], strides = [1, 1]} : vector<16x24xf32> to vector<8x24xf32>
    %68 = vector.extract_strided_slice %7 {offsets = [0, 16], sizes = [24, 16], strides = [1, 1]} : vector<24x32xf32> to vector<24x16xf32>
    %69 = vector.extract_strided_slice %8 {offsets = [0, 16], sizes = [16, 16], strides = [1, 1]} : vector<16x32xf32> to vector<16x16xf32>
    %70 = vector.extract_strided_slice %9 {offsets = [0, 8], sizes = [16, 8], strides = [1, 1]} : vector<16x16xf32> to vector<16x8xf32>
    %cst_35 = arith.constant dense<0.000000e+00> : vector<8x16xf32>
    %71 = tpu.matmul %67, %68, %cst_35 {dimension_numbers = #tpu.dot_dimension_numbers<[1], [0], [0], [1], [0, 0, 1, 1], [], []>} : vector<8x24xf32>, vector<24x16xf32>, vector<8x16xf32> -> vector<8x16xf32>
    %cst_36 = arith.constant dense<0.000000e+00> : vector<16x16xf32>
    %72 = tpu.matmul %70, %71, %cst_36 {dimension_numbers = #tpu.dot_dimension_numbers<[1], [0], [0], [1], [0, 0, 1, 1], [], []>} : vector<16x8xf32>, vector<8x16xf32>, vector<16x16xf32> -> vector<16x16xf32>
    %73 = arith.addf %69, %72 : vector<16x16xf32>
    %74 = math.tanh %73 : vector<16x16xf32>
    %cst_37 = arith.constant dense<0.000000e+00> : vector<16x8xf32>
    %75 = tpu.matmul %69, %71, %cst_37 {dimension_numbers = #tpu.dot_dimension_numbers<[1], [1], [0], [0], [0, 0, 1, 0], [], []>} : vector<16x16xf32>, vector<8x16xf32>, vector<16x8xf32> -> vector<16x8xf32>
    %76 = arith.addf %70, %75 : vector<16x8xf32>
    %77 = math.tanh %76 : vector<16x8xf32>
    %78 = vector.broadcast %3 : vector<16x1xf32> to vector<16x16xf32>
    %79 = arith.mulf %78, %74 : vector<16x16xf32>
    %cst_38 = arith.constant dense<0.000000e+00> : vector<16xf32>
    %80 = vector.multi_reduction <add>, %79, %cst_38 [0] : vector<16x16xf32> to vector<16xf32>
    %81 = vector.shape_cast %80 : vector<16xf32> to vector<1x16xf32>
    %cst_39 = arith.constant dense<0xFF800000> : vector<1xf32>
    %82 = vector.multi_reduction <maximumf>, %81, %cst_39 [1] : vector<1x16xf32> to vector<1xf32>
    %83 = vector.shape_cast %82 : vector<1xf32> to vector<1x1xf32>
    %84 = vector.broadcast %83 : vector<1x1xf32> to vector<1x16xf32>
    %85 = arith.subf %81, %84 : vector<1x16xf32>
    %86 = math.exp %85 : vector<1x16xf32>
    %cst_40 = arith.constant dense<0.000000e+00> : vector<1xf32>
    %87 = vector.multi_reduction <add>, %86, %cst_40 [1] : vector<1x16xf32> to vector<1xf32>
    %88 = vector.shape_cast %87 : vector<1xf32> to vector<1x1xf32>
    %89 = tpu.reciprocal %88 {approx = true} : vector<1x1xf32> -> vector<1x1xf32>
    %90 = arith.mulf %88, %89 : vector<1x1xf32>
    %cst_41 = arith.constant 2.000000e+00 : f32
    %91 = vector.broadcast %cst_41 : f32 to vector<1x1xf32>
    %92 = arith.subf %91, %90 : vector<1x1xf32>
    %93 = arith.mulf %89, %92 : vector<1x1xf32>
    %94 = vector.broadcast %93 : vector<1x1xf32> to vector<1x16xf32>
    %95 = arith.mulf %86, %94 : vector<1x16xf32>
    %96 = vector.broadcast %4 : vector<16x1xf32> to vector<16x8xf32>
    %97 = arith.mulf %96, %77 : vector<16x8xf32>
    %cst_42 = arith.constant dense<0.000000e+00> : vector<8xf32>
    %98 = vector.multi_reduction <add>, %97, %cst_42 [0] : vector<16x8xf32> to vector<8xf32>
    %99 = vector.shape_cast %98 : vector<8xf32> to vector<1x8xf32>
    %cst_43 = arith.constant dense<0xFF800000> : vector<1xf32>
    %100 = vector.multi_reduction <maximumf>, %99, %cst_43 [1] : vector<1x8xf32> to vector<1xf32>
    %101 = vector.shape_cast %100 : vector<1xf32> to vector<1x1xf32>
    %102 = vector.broadcast %101 : vector<1x1xf32> to vector<1x8xf32>
    %103 = arith.subf %99, %102 : vector<1x8xf32>
    %104 = math.exp %103 : vector<1x8xf32>
    %cst_44 = arith.constant dense<0.000000e+00> : vector<1xf32>
    %105 = vector.multi_reduction <add>, %104, %cst_44 [1] : vector<1x8xf32> to vector<1xf32>
    %106 = vector.shape_cast %105 : vector<1xf32> to vector<1x1xf32>
    %107 = tpu.reciprocal %106 {approx = true} : vector<1x1xf32> -> vector<1x1xf32>
    %108 = arith.mulf %106, %107 : vector<1x1xf32>
    %cst_45 = arith.constant 2.000000e+00 : f32
    %109 = vector.broadcast %cst_45 : f32 to vector<1x1xf32>
    %110 = arith.subf %109, %108 : vector<1x1xf32>
    %111 = arith.mulf %107, %110 : vector<1x1xf32>
    %112 = vector.broadcast %111 : vector<1x1xf32> to vector<1x8xf32>
    %113 = arith.mulf %104, %112 : vector<1x8xf32>
    %cst_46 = arith.constant dense<0.000000e+00> : vector<1x32xf32>
    %114 = tpu.matmul %95, %66, %cst_46 {dimension_numbers = #tpu.dot_dimension_numbers<[1], [0], [0], [1], [0, 0, 1, 1], [], []>} : vector<1x16xf32>, vector<16x32xf32>, vector<1x32xf32> -> vector<1x32xf32>
    %cst_47 = arith.constant dense<0.000000e+00> : vector<1x24xf32>
    %115 = tpu.matmul %113, %67, %cst_47 {dimension_numbers = #tpu.dot_dimension_numbers<[1], [0], [0], [1], [0, 0, 1, 1], [], []>} : vector<1x8xf32>, vector<8x24xf32>, vector<1x24xf32> -> vector<1x24xf32>
    %c1 = arith.constant 1 : index
    %c0_48 = arith.constant 0 : index
    %116 = vector.load %arg8[%c1, %c0_48] : memref<2x128xf32, #tpu.memory_space<vmem>>, vector<1x16xf32>
    tpu.vector_store %arg8[%c1, %c0_48], %95 {strides = array<i32>} : memref<2x128xf32, #tpu.memory_space<vmem>>, vector<1x16xf32>,
    %c1_49 = arith.constant 1 : index
    %c16_50 = arith.constant 16 : index
    %117 = vector.load %arg8[%c1_49, %c16_50] : memref<2x128xf32, #tpu.memory_space<vmem>>, vector<1x8xf32>
    tpu.vector_store %arg8[%c1_49, %c16_50], %113 {strides = array<i32>} : memref<2x128xf32, #tpu.memory_space<vmem>>, vector<1x8xf32>,
    %c1_51 = arith.constant 1 : index
    %c24_52 = arith.constant 24 : index
    %118 = vector.load %arg8[%c1_51, %c24_52] : memref<2x128xf32, #tpu.memory_space<vmem>>, vector<1x32xf32>
    tpu.vector_store %arg8[%c1_51, %c24_52], %114 {strides = array<i32>} : memref<2x128xf32, #tpu.memory_space<vmem>>, vector<1x32xf32>,
    %c1_53 = arith.constant 1 : index
    %c56_54 = arith.constant 56 : index
    %119 = vector.load %arg8[%c1_53, %c56_54] : memref<2x128xf32, #tpu.memory_space<vmem>>, vector<1x24xf32>
    tpu.vector_store %arg8[%c1_53, %c56_54], %115 {strides = array<i32>} : memref<2x128xf32, #tpu.memory_space<vmem>>, vector<1x24xf32>,
    return
  }
  func.func @transform_0(%arg0: i32) -> (i32, i32) {
    %c0_i32 = arith.constant 0 : i32
    %c0_i32_0 = arith.constant 0 : i32
    %c0_i32_1 = arith.constant 0 : i32
    return %c0_i32, %c0_i32_0 : i32, i32
  }
  func.func @transform_1(%arg0: i32) -> (i32, i32) {
    %c0_i32 = arith.constant 0 : i32
    %c0_i32_0 = arith.constant 0 : i32
    %c0_i32_1 = arith.constant 0 : i32
    return %c0_i32, %c0_i32_0 : i32, i32
  }
  func.func @transform_2(%arg0: i32) -> (i32, i32) {
    %c0_i32 = arith.constant 0 : i32
    %c0_i32_0 = arith.constant 0 : i32
    %c0_i32_1 = arith.constant 0 : i32
    return %c0_i32, %c0_i32_0 : i32, i32
  }
  func.func @transform_3(%arg0: i32) -> (i32, i32) {
    %c0_i32 = arith.constant 0 : i32
    %c0_i32_0 = arith.constant 0 : i32
    %c0_i32_1 = arith.constant 0 : i32
    return %c0_i32, %c0_i32_0 : i32, i32
  }
  func.func @transform_4(%arg0: i32) -> (i32, i32) {
    %c0_i32 = arith.constant 0 : i32
    %c0_i32_0 = arith.constant 0 : i32
    %c0_i32_1 = arith.constant 0 : i32
    return %c0_i32, %c0_i32_0 : i32, i32
  }
  func.func @transform_5(%arg0: i32) -> (i32, i32) {
    %c0_i32 = arith.constant 0 : i32
    %c0_i32_0 = arith.constant 0 : i32
    return %arg0, %c0_i32 : i32, i32
  }
  func.func @transform_6(%arg0: i32) -> (i32, i32) {
    %c0_i32 = arith.constant 0 : i32
    %c0_i32_0 = arith.constant 0 : i32
    return %arg0, %c0_i32 : i32, i32
  }
  func.func @transform_7(%arg0: i32) -> (i32, i32) {
    %c0_i32 = arith.constant 0 : i32
    %c0_i32_0 = arith.constant 0 : i32
    return %arg0, %c0_i32 : i32, i32
  }
}

</mosaic_0001>

<llo_original>
// kernel: tpu_custom_call.1
$region0: #{tpu_custom_call.1}
  #allocation0 [shape = 'u32[]', space=smem, size = 0x4, offset = 0x4, fixed_abs, tag = 'smem constant byte address 0x4 - core index']
  #allocation1 [shape = 'u32[144,128]{1,0:T(1,128)}', space=vmem, size = 0x12000, scoped, tag = 'internal scratch']
  %s0 = inlined_call_operand.hbm [shape: f32[24,32], index: 0, kind: input, shape index: {}]
  %s1 = inlined_call_operand.vmem [shape: f32[16,32], index: 1, kind: input, shape index: {}]
  %s2 = inlined_call_operand.hbm [shape: f32[16,24], index: 2, kind: input, shape index: {}]
  %s3 = inlined_call_operand.vmem [shape: f32[16,1], index: 3, kind: input, shape index: {}]
  %s4 = inlined_call_operand.vmem [shape: f32[16,1], index: 4, kind: input, shape index: {}]
  %s5 = inlined_call_operand.vmem [shape: f32[32,32], index: 5, kind: input, shape index: {}]
  %s6 = inlined_call_operand.hbm [shape: f32[16,24], index: 6, kind: input, shape index: {}]
  %s7 = inlined_call_operand.hbm [shape: f32[2,128], index: 7, kind: output, shape index: {}]
  %s8 = sld [smem:[#allocation0]]
  $region50: #{tpu_custom_call.1} parent=0
    _
  %s10 = ssub.s32 1, %s8
  %s11 = scalar_select 0, %s10, %s8
  $region1: #{tpu_custom_call.1} parent=0
    #allocation2 [shape = 'u8[12288]{0}', space=vmem, size = 0x3000, scoped, tag = 'input window, operand 0, single buffered']
    #allocation3 [shape = 's32[1]{0}', space=sflag, size = 0x4, scoped, tag = 'scoped memory for tpu_custom_call.1']
    #allocation4 [shape = 's32[1]{0}', space=sflag, size = 0x4, scoped, tag = 'scoped memory for tpu_custom_call.1']
    #allocation5 [shape = 'u8[8192]{0}', space=vmem, size = 0x2000, scoped, tag = 'input window, operand 2, single buffered']
    #allocation6 [shape = 's32[1]{0}', space=sflag, size = 0x4, scoped, tag = 'scoped memory for tpu_custom_call.1']
    #allocation7 [shape = 'u8[8192]{0}', space=vmem, size = 0x2000, scoped, tag = 'input window, operand 6, single buffered']
    #allocation8 [shape = 'u8[1024]{0}', space=vmem, size = 0x400, scoped, tag = 'output window, operand 0, single buffered']
    %12 = vsyncpa [#allocation3], 0
    %13 = vsyncpa [#allocation6], 0
    %14 = vsyncpa [#allocation4], 0
    // Predicated region
    $region2: #{tpu_custom_call.1} parent=1 // pred_check
      _
    $region3: #{tpu_custom_call.1} parent=1 // pred_check_branch
      %16 = sbr.rel (0) target = $region5
    $region4: #{tpu_custom_call.1} parent=1 // pred_region
      %s18 = ssub.s32 384, 384
      %19 = vsyncadd [#allocation3], %s18
      %s20 = sshll.u32 [#allocation2], 4
      %s21 = int_to_ptr.vmem [resolvable:$true] %s20
      %26 = dma.hbm_to_vmem [thread:$0]  %s0, 384, %s21, [#allocation3], 128, 128, 8
    $region5: #{tpu_custom_call.1} parent=1 // pred_fallthru
      _
    // Predicated region
    $region6: #{tpu_custom_call.1} parent=1 // pred_check
      _
    $region7: #{tpu_custom_call.1} parent=1 // pred_check_branch
      %28 = sbr.rel (0) target = $region9
    $region8: #{tpu_custom_call.1} parent=1 // pred_region
      _
    $region9: #{tpu_custom_call.1} parent=1 // pred_fallthru
      _
    // Predicated region
    $region10: #{tpu_custom_call.1} parent=1 // pred_check
      _
    $region11: #{tpu_custom_call.1} parent=1 // pred_check_branch
      %30 = sbr.rel (0) target = $region13
    $region12: #{tpu_custom_call.1} parent=1 // pred_region
      %s32 = ssub.s32 256, 256
      %33 = vsyncadd [#allocation6], %s32
      %s34 = sshll.u32 [#allocation5], 4
      %s35 = int_to_ptr.vmem [resolvable:$true] %s34
      %40 = dma.hbm_to_vmem [thread:$0]  %s2, 256, %s35, [#allocation6], 128, 128, 8
    $region13: #{tpu_custom_call.1} parent=1 // pred_fallthru
      _
    // Predicated region
    $region14: #{tpu_custom_call.1} parent=1 // pred_check
      _
    $region15: #{tpu_custom_call.1} parent=1 // pred_check_branch
      %42 = sbr.rel (0) target = $region17
    $region16: #{tpu_custom_call.1} parent=1 // pred_region
      _
    $region17: #{tpu_custom_call.1} parent=1 // pred_fallthru
      _
    // Predicated region
    $region18: #{tpu_custom_call.1} parent=1 // pred_check
      _
    $region19: #{tpu_custom_call.1} parent=1 // pred_check_branch
      %44 = sbr.rel (0) target = $region21
    $region20: #{tpu_custom_call.1} parent=1 // pred_region
      _
    $region21: #{tpu_custom_call.1} parent=1 // pred_fallthru
      _
    // Predicated region
    $region22: #{tpu_custom_call.1} parent=1 // pred_check
      _
    $region23: #{tpu_custom_call.1} parent=1 // pred_check_branch
      %46 = sbr.rel (0) target = $region25
    $region24: #{tpu_custom_call.1} parent=1 // pred_region
      _
    $region25: #{tpu_custom_call.1} parent=1 // pred_fallthru
      _
    // Predicated region
    $region26: #{tpu_custom_call.1} parent=1 // pred_check
      _
    $region27: #{tpu_custom_call.1} parent=1 // pred_check_branch
      %48 = sbr.rel (0) target = $region29
    $region28: #{tpu_custom_call.1} parent=1 // pred_region
      %s50 = ssub.s32 256, 256
      %51 = vsyncadd [#allocation6], %s50
      %s52 = sshll.u32 [#allocation7], 4
      %s53 = int_to_ptr.vmem [resolvable:$true] %s52
      %58 = dma.hbm_to_vmem [thread:$0]  %s6, 256, %s53, [#allocation6], 128, 128, 8
    $region29: #{tpu_custom_call.1} parent=1 // pred_fallthru
      _
    // Predicated region
    $region30: #{tpu_custom_call.1} parent=1 // pred_check
      _
    $region31: #{tpu_custom_call.1} parent=1 // pred_check_branch
      %60 = sbr.rel (0) target = $region33
    $region32: #{tpu_custom_call.1} parent=1 // pred_region
      %61 = dma.done [#allocation3], 384
    $region33: #{tpu_custom_call.1} parent=1 // pred_fallthru
      _
    // Predicated region
    $region34: #{tpu_custom_call.1} parent=1 // pred_check
      _
    $region35: #{tpu_custom_call.1} parent=1 // pred_check_branch
      %63 = sbr.rel (0) target = $region37
    $region36: #{tpu_custom_call.1} parent=1 // pred_region
      %64 = dma.done [#allocation6], 256
    $region37: #{tpu_custom_call.1} parent=1 // pred_fallthru
      _
    // Predicated region
    $region38: #{tpu_custom_call.1} parent=1 // pred_check
      _
    $region39: #{tpu_custom_call.1} parent=1 // pred_check_branch
      %66 = sbr.rel (0) target = $region41
    $region40: #{tpu_custom_call.1} parent=1 // pred_region
      %67 = dma.done [#allocation6], 256
    $region41: #{tpu_custom_call.1} parent=1 // pred_fallthru
      _
    %v68 = vld [vmem:[#allocation2] sm:$0xff]
    %v69 = vld [vmem:[#allocation2 + $0x8] sm:$0xff]
    %v70 = vld [vmem:[#allocation2 + $0x10] sm:$0xff]
    %v71 = vld [vmem:[%s1] sm:$0xff]
    %v72 = vld [vmem:[%s1 + $0x8] sm:$0xff]
    %v73 = vld [vmem:[#allocation5] sm:$0xff]
    %v74 = vld [vmem:[#allocation5 + $0x8] sm:$0xff]
    %v75 = vld [vmem:[%s3] sm:$0xff]
    %v76 = vld [vmem:[%s3 + $0x8] sm:$0xff]
    %v77 = vld [vmem:[%s4] sm:$0xff]
    %v78 = vld [vmem:[%s4 + $0x8] sm:$0xff]
    %v79 = vld [vmem:[%s5] sm:$0xff]
    %v80 = vld [vmem:[%s5 + $0x8] sm:$0xff]
    %v81 = vld [vmem:[%s5 + $0x10] sm:$0xff]
    %v82 = vld [vmem:[%s5 + $0x18] sm:$0xff]
    %v83 = vld [vmem:[#allocation7] sm:$0xff]
    %v84 = vld [vmem:[#allocation7 + $0x8] sm:$0xff]
    %vm85 = vcmask 261120
    %v87 = vsel %vm85, %v68, 0
    %v90 = vsel %vm85, %v69, 0
    %v93 = vsel %vm85, %v70, 0
    %v96 = vsel %vm85, %v79, 0
    %v99 = vsel %vm85, %v80, 0
    %v102 = vsel %vm85, %v81, 0
    %v105 = vsel %vm85, %v82, 0
    %107 = vmatprep.subr.mxu0 0.0
    %108 = vmatpush1.xpose.msra.mxu0 %v96
    %109 = vmatprep.subr.mxu0 0.0
    %110 = vmatpush1.xpose.msra.mxu0 %v99
    %111 = vmatprep.subr.mxu0 0.0
    %112 = vmatpush1.xpose.msra.mxu0 %v102
    %113 = vmatprep.subr.mxu0 0.0
    %114 = vmatpush1.xpose.msra.mxu0 %v105
    %115 = vmatprep.subr.mxu0 0.0
    %116 = vmatpush1.xpose.msra.mxu0 0.0
    %117 = vmatprep.subr.mxu0 0.0
    %118 = vmatpush1.xpose.msra.mxu0 0.0
    %119 = vmatprep.subr.mxu0 0.0
    %120 = vmatpush1.xpose.msra.mxu0 0.0
    %121 = vmatprep.subr.mxu0 0.0
    %122 = vmatpush1.xpose.msra.mxu0 0.0
    %123 = vmatprep.subr.mxu0 0.0
    %124 = vmatpush1.xpose.msra.mxu0 0.0
    %125 = vmatprep.subr.mxu0 0.0
    %126 = vmatpush1.xpose.msra.mxu0 0.0
    %127 = vmatprep.subr.mxu0 0.0
    %128 = vmatpush1.xpose.msra.mxu0 0.0
    %129 = vmatprep.subr.mxu0 0.0
    %130 = vmatpush1.xpose.msra.mxu0 0.0
    %131 = vmatprep.subr.mxu0 0.0
    %132 = vmatpush1.xpose.msra.mxu0 0.0
    %133 = vmatprep.subr.mxu0 0.0
    %134 = vmatpush1.xpose.msra.mxu0 0.0
    %135 = vmatprep.subr.mxu0 0.0
    %136 = vmatpush1.xpose.msra.mxu0 0.0
    %137 = vmatprep.subr.mxu0 0.0
    %138 = vmatpush1.xpose.msra.mxu0 0.0
    %139 = vmatprep.subr.mxu0 0.0
    %140 = vmatpush1.xpose.msra.mxu0 0.0
    %141 = vmatprep.subr.mxu0 0.0
    %142 = vmatpush1.xpose.msra.mxu0 0.0
    %143 = vmatprep.subr.mxu0 0.0
    %144 = vmatpush1.xpose.msra.mxu0 0.0
    %145 = vmatprep.subr.mxu0 0.0
    %146 = vmatpush1.xpose.msra.mxu0 0.0
    %147 = vmatprep.subr.mxu0 0.0
    %148 = vmatpush1.xpose.msra.mxu0 0.0
    %149 = vmatprep.subr.mxu0 0.0
    %150 = vmatpush1.xpose.msra.mxu0 0.0
    %151 = vmatprep.subr.mxu0 0.0
    %152 = vmatpush1.xpose.msra.mxu0 0.0
    %153 = vmatprep.subr.mxu0 0.0
    %154 = vmatpush1.xpose.msra.mxu0 0.0
    %155 = vmatprep.subr.mxu0 0.0
    %156 = vmatpush1.xpose.msra.mxu0 0.0
    %157 = vmatprep.subr.mxu0 0.0
    %158 = vmatpush1.xpose.msra.mxu0 0.0
    %159 = vmatprep.subr.mxu0 0.0
    %160 = vmatpush1.xpose.msra.mxu0 0.0
    %161 = vmatprep.subr.mxu0 0.0
    %162 = vmatpush1.xpose.msra.mxu0 0.0
    %163 = vmatprep.subr.mxu0 0.0
    %164 = vmatpush1.xpose.msra.mxu0 0.0
    %165 = vmatprep.subr.mxu0 0.0
    %166 = vmatpush1.xpose.msra.mxu0 0.0
    %167 = vmatprep.subr.mxu0 0.0
    %168 = vmatpush1.xpose.msra.mxu0 0.0
    %169 = vmatprep.subr.mxu0 0.0
    %170 = vmatpush1.xpose.msra.mxu0 0.0
    %171 = vmatprep.mubr.f32.mxu0 0.0
    %172 = vmatmul.mubr.f32.gmra.mrb[0].mxu0 %v87
    %v173 = vpop.f32.mrb[0].mxu0
    %v174 = vadd.f32 0.0, %v173
    %v175 = vpop.f32.mrb[0].mxu0
    %176 = vmatprep.mubr.f32.mxu0 0.0
    %177 = vmatmul.mubr.f32.gmra.mrb[0].mxu0 %v90
    %v178 = vpop.f32.mrb[0].mxu0
    %v179 = vadd.f32 0.0, %v178
    %v180 = vpop.f32.mrb[0].mxu0
    %181 = vmatprep.mubr.f32.mxu0 0.0
    %182 = vmatmul.mubr.f32.gmra.mrb[0].mxu0 %v93
    %v183 = vpop.f32.mrb[0].mxu0
    %v184 = vadd.f32 0.0, %v183
    %v185 = vpop.f32.mrb[0].mxu0
    %186 = vdwg.mxu0
    %v188 = vsel %vm85, %v71, 0
    %v191 = vsel %vm85, %v72, 0
    %193 = vmatprep.subr.mxu0 0.0
    %194 = vmatpush1.xpose.msra.mxu0 %v96
    %195 = vmatprep.subr.mxu0 0.0
    %196 = vmatpush1.xpose.msra.mxu0 %v99
    %197 = vmatprep.subr.mxu0 0.0
    %198 = vmatpush1.xpose.msra.mxu0 %v102
    %199 = vmatprep.subr.mxu0 0.0
    %200 = vmatpush1.xpose.msra.mxu0 %v105
    %201 = vmatprep.subr.mxu0 0.0
    %202 = vmatpush1.xpose.msra.mxu0 0.0
    %203 = vmatprep.subr.mxu0 0.0
    %204 = vmatpush1.xpose.msra.mxu0 0.0
    %205 = vmatprep.subr.mxu0 0.0
    %206 = vmatpush1.xpose.msra.mxu0 0.0
    %207 = vmatprep.subr.mxu0 0.0
    %208 = vmatpush1.xpose.msra.mxu0 0.0
    %209 = vmatprep.subr.mxu0 0.0
    %210 = vmatpush1.xpose.msra.mxu0 0.0
    %211 = vmatprep.subr.mxu0 0.0
    %212 = vmatpush1.xpose.msra.mxu0 0.0
    %213 = vmatprep.subr.mxu0 0.0
    %214 = vmatpush1.xpose.msra.mxu0 0.0
    %215 = vmatprep.subr.mxu0 0.0
    %216 = vmatpush1.xpose.msra.mxu0 0.0
    %217 = vmatprep.subr.mxu0 0.0
    %218 = vmatpush1.xpose.msra.mxu0 0.0
    %219 = vmatprep.subr.mxu0 0.0
    %220 = vmatpush1.xpose.msra.mxu0 0.0
    %221 = vmatprep.subr.mxu0 0.0
    %222 = vmatpush1.xpose.msra.mxu0 0.0
    %223 = vmatprep.subr.mxu0 0.0
    %224 = vmatpush1.xpose.msra.mxu0 0.0
    %225 = vmatprep.subr.mxu0 0.0
    %226 = vmatpush1.xpose.msra.mxu0 0.0
    %227 = vmatprep.subr.mxu0 0.0
    %228 = vmatpush1.xpose.msra.mxu0 0.0
    %229 = vmatprep.subr.mxu0 0.0
    %230 = vmatpush1.xpose.msra.mxu0 0.0
    %231 = vmatprep.subr.mxu0 0.0
    %232 = vmatpush1.xpose.msra.mxu0 0.0
    %233 = vmatprep.subr.mxu0 0.0
    %234 = vmatpush1.xpose.msra.mxu0 0.0
    %235 = vmatprep.subr.mxu0 0.0
    %236 = vmatpush1.xpose.msra.mxu0 0.0
    %237 = vmatprep.subr.mxu0 0.0
    %238 = vmatpush1.xpose.msra.mxu0 0.0
    %239 = vmatprep.subr.mxu0 0.0
    %240 = vmatpush1.xpose.msra.mxu0 0.0
    %241 = vmatprep.subr.mxu0 0.0
    %242 = vmatpush1.xpose.msra.mxu0 0.0
    %243 = vmatprep.subr.mxu0 0.0
    %244 = vmatpush1.xpose.msra.mxu0 0.0
    %245 = vmatprep.subr.mxu0 0.0
    %246 = vmatpush1.xpose.msra.mxu0 0.0
    %247 = vmatprep.subr.mxu0 0.0
    %248 = vmatpush1.xpose.msra.mxu0 0.0
    %249 = vmatprep.subr.mxu0 0.0
    %250 = vmatpush1.xpose.msra.mxu0 0.0
    %251 = vmatprep.subr.mxu0 0.0
    %252 = vmatpush1.xpose.msra.mxu0 0.0
    %253 = vmatprep.subr.mxu0 0.0
    %254 = vmatpush1.xpose.msra.mxu0 0.0
    %255 = vmatprep.subr.mxu0 0.0
    %256 = vmatpush1.xpose.msra.mxu0 0.0
    %257 = vmatprep.mubr.f32.mxu0 0.0
    %258 = vmatmul.mubr.f32.gmra.mrb[0].mxu0 %v188
    %v259 = vpop.f32.mrb[0].mxu0
    %v260 = vadd.f32 0.0, %v259
    %v261 = vpop.f32.mrb[0].mxu0
    %262 = vmatprep.mubr.f32.mxu0 0.0
    %263 = vmatmul.mubr.f32.gmra.mrb[0].mxu0 %v191
    %v264 = vpop.f32.mrb[0].mxu0
    %v265 = vadd.f32 0.0, %v264
    %v266 = vpop.f32.mrb[0].mxu0
    %267 = vdwg.mxu0
    %vm268 = vcmask 195584
    %v270 = vsel %vm268, %v73, 0
    %v273 = vsel %vm268, %v74, 0
    %v276 = vsel %vm268, %v83, 0
    %v279 = vsel %vm268, %v84, 0
    %281 = vmatprep.subr.mxu0 0.0
    %282 = vmatpush1.xpose.msra.mxu0 %v276
    %283 = vmatprep.subr.mxu0 0.0
    %284 = vmatpush1.xpose.msra.mxu0 %v279
    %285 = vmatprep.subr.mxu0 0.0
    %286 = vmatpush1.xpose.msra.mxu0 0.0
    %287 = vmatprep.subr.mxu0 0.0
    %288 = vmatpush1.xpose.msra.mxu0 0.0
    %289 = vmatprep.subr.mxu0 0.0
    %290 = vmatpush1.xpose.msra.mxu0 0.0
    %291 = vmatprep.subr.mxu0 0.0
    %292 = vmatpush1.xpose.msra.mxu0 0.0
    %293 = vmatprep.subr.mxu0 0.0
    %294 = vmatpush1.xpose.msra.mxu0 0.0
    %295 = vmatprep.subr.mxu0 0.0
    %296 = vmatpush1.xpose.msra.mxu0 0.0
    %297 = vmatprep.subr.mxu0 0.0
    %298 = vmatpush1.xpose.msra.mxu0 0.0
    %299 = vmatprep.subr.mxu0 0.0
    %300 = vmatpush1.xpose.msra.mxu0 0.0
    %301 = vmatprep.subr.mxu0 0.0
    %302 = vmatpush1.xpose.msra.mxu0 0.0
    %303 = vmatprep.subr.mxu0 0.0
    %304 = vmatpush1.xpose.msra.mxu0 0.0
    %305 = vmatprep.subr.mxu0 0.0
    %306 = vmatpush1.xpose.msra.mxu0 0.0
    %307 = vmatprep.subr.mxu0 0.0
    %308 = vmatpush1.xpose.msra.mxu0 0.0
    %309 = vmatprep.subr.mxu0 0.0
    %310 = vmatpush1.xpose.msra.mxu0 0.0
    %311 = vmatprep.subr.mxu0 0.0
    %312 = vmatpush1.xpose.msra.mxu0 0.0
    %313 = vmatprep.subr.mxu0 0.0
    %314 = vmatpush1.xpose.msra.mxu0 0.0
    %315 = vmatprep.subr.mxu0 0.0
    %316 = vmatpush1.xpose.msra.mxu0 0.0
    %317 = vmatprep.subr.mxu0 0.0
    %318 = vmatpush1.xpose.msra.mxu0 0.0
    %319 = vmatprep.subr.mxu0 0.0
    %320 = vmatpush1.xpose.msra.mxu0 0.0
    %321 = vmatprep.subr.mxu0 0.0
    %322 = vmatpush1.xpose.msra.mxu0 0.0
    %323 = vmatprep.subr.mxu0 0.0
    %324 = vmatpush1.xpose.msra.mxu0 0.0
    %325 = vmatprep.subr.mxu0 0.0
    %326 = vmatpush1.xpose.msra.mxu0 0.0
    %327 = vmatprep.subr.mxu0 0.0
    %328 = vmatpush1.xpose.msra.mxu0 0.0
    %329 = vmatprep.subr.mxu0 0.0
    %330 = vmatpush1.xpose.msra.mxu0 0.0
    %331 = vmatprep.subr.mxu0 0.0
    %332 = vmatpush1.xpose.msra.mxu0 0.0
    %333 = vmatprep.subr.mxu0 0.0
    %334 = vmatpush1.xpose.msra.mxu0 0.0
    %335 = vmatprep.subr.mxu0 0.0
    %336 = vmatpush1.xpose.msra.mxu0 0.0
    %337 = vmatprep.subr.mxu0 0.0
    %338 = vmatpush1.xpose.msra.mxu0 0.0
    %339 = vmatprep.subr.mxu0 0.0
    %340 = vmatpush1.xpose.msra.mxu0 0.0
    %341 = vmatprep.subr.mxu0 0.0
    %342 = vmatpush1.xpose.msra.mxu0 0.0
    %343 = vmatprep.subr.mxu0 0.0
    %344 = vmatpush1.xpose.msra.mxu0 0.0
    %345 = vmatprep.mubr.f32.mxu0 0.0
    %346 = vmatmul.mubr.f32.gmra.mrb[0].mxu0 %v270
    %v347 = vpop.f32.mrb[0].mxu0
    %v348 = vadd.f32 0.0, %v347
    %v349 = vpop.f32.mrb[0].mxu0
    %350 = vmatprep.mubr.f32.mxu0 0.0
    %351 = vmatmul.mubr.f32.gmra.mrb[0].mxu0 %v273
    %v352 = vpop.f32.mrb[0].mxu0
    %v353 = vadd.f32 0.0, %v352
    %v354 = vpop.f32.mrb[0].mxu0
    %355 = vdwg.mxu0
    %vm356 = vcmask 1042048
    %357 = vst.msk [vmem:[#allocation8] sm:$0x3] %vm356, 0.0
    %358 = vmatprep.subr.mxu0 0.0
    %359 = vmatpush1.msra.mxu0 %v174
    %360 = vmatprep.subr.mxu0 0.0
    %361 = vmatpush1.msra.mxu0 %v179
    %362 = vmatprep.subr.mxu0 0.0
    %363 = vmatpush1.msra.mxu0 %v184
    %364 = vmatprep.subr.mxu0 0.0
    %365 = vmatpush1.msra.mxu0 0.0
    %366 = vmatprep.subr.mxu0 0.0
    %367 = vmatpush1.msra.mxu0 0.0
    %368 = vmatprep.subr.mxu0 0.0
    %369 = vmatpush1.msra.mxu0 0.0
    %370 = vmatprep.subr.mxu0 0.0
    %371 = vmatpush1.msra.mxu0 0.0
    %372 = vmatprep.subr.mxu0 0.0
    %373 = vmatpush1.msra.mxu0 0.0
    %374 = vmatprep.subr.mxu0 0.0
    %375 = vmatpush1.msra.mxu0 0.0
    %376 = vmatprep.subr.mxu0 0.0
    %377 = vmatpush1.msra.mxu0 0.0
    %378 = vmatprep.subr.mxu0 0.0
    %379 = vmatpush1.msra.mxu0 0.0
    %380 = vmatprep.subr.mxu0 0.0
    %381 = vmatpush1.msra.mxu0 0.0
    %382 = vmatprep.subr.mxu0 0.0
    %383 = vmatpush1.msra.mxu0 0.0
    %384 = vmatprep.subr.mxu0 0.0
    %385 = vmatpush1.msra.mxu0 0.0
    %386 = vmatprep.subr.mxu0 0.0
    %387 = vmatpush1.msra.mxu0 0.0
    %388 = vmatprep.subr.mxu0 0.0
    %389 = vmatpush1.msra.mxu0 0.0
    %390 = vmatprep.subr.mxu0 0.0
    %391 = vmatpush1.msra.mxu0 0.0
    %392 = vmatprep.subr.mxu0 0.0
    %393 = vmatpush1.msra.mxu0 0.0
    %394 = vmatprep.subr.mxu0 0.0
    %395 = vmatpush1.msra.mxu0 0.0
    %396 = vmatprep.subr.mxu0 0.0
    %397 = vmatpush1.msra.mxu0 0.0
    %398 = vmatprep.subr.mxu0 0.0
    %399 = vmatpush1.msra.mxu0 0.0
    %400 = vmatprep.subr.mxu0 0.0
    %401 = vmatpush1.msra.mxu0 0.0
    %402 = vmatprep.subr.mxu0 0.0
    %403 = vmatpush1.msra.mxu0 0.0
    %404 = vmatprep.subr.mxu0 0.0
    %405 = vmatpush1.msra.mxu0 0.0
    %406 = vmatprep.subr.mxu0 0.0
    %407 = vmatpush1.msra.mxu0 0.0
    %408 = vmatprep.subr.mxu0 0.0
    %409 = vmatpush1.msra.mxu0 0.0
    %410 = vmatprep.subr.mxu0 0.0
    %411 = vmatpush1.msra.mxu0 0.0
    %412 = vmatprep.subr.mxu0 0.0
    %413 = vmatpush1.msra.mxu0 0.0
    %414 = vmatprep.subr.mxu0 0.0
    %415 = vmatpush1.msra.mxu0 0.0
    %416 = vmatprep.subr.mxu0 0.0
    %417 = vmatpush1.msra.mxu0 0.0
    %418 = vmatprep.subr.mxu0 0.0
    %419 = vmatpush1.msra.mxu0 0.0
    %420 = vmatprep.subr.mxu0 0.0
    %421 = vmatpush1.msra.mxu0 0.0
    %422 = vmatprep.mubr.f32.mxu0 0.0
    %423 = vmatmul.mubr.f32.gmra.mrb[0].mxu0 %v276
    %v424 = vpop.f32.mrb[0].mxu0
    %v425 = vadd.f32 0.0, %v424
    %v426 = vpop.f32.mrb[0].mxu0
    %427 = vdwg.mxu0
    %vm428 = vcmask 64512
    %v430 = vsel %vm428, %v348, 0
    %v433 = vsel %vm428, %v353, 0
    %435 = vmatprep.subr.mxu0 0.0
    %436 = vmatpush1.msra.mxu0 %v425
    %437 = vmatprep.subr.mxu0 0.0
    %438 = vmatpush1.msra.mxu0 0.0
    %439 = vmatprep.subr.mxu0 0.0
    %440 = vmatpush1.msra.mxu0 0.0
    %441 = vmatprep.subr.mxu0 0.0
    %442 = vmatpush1.msra.mxu0 0.0
    %443 = vmatprep.subr.mxu0 0.0
    %444 = vmatpush1.msra.mxu0 0.0
    %445 = vmatprep.subr.mxu0 0.0
    %446 = vmatpush1.msra.mxu0 0.0
    %447 = vmatprep.subr.mxu0 0.0
    %448 = vmatpush1.msra.mxu0 0.0
    %449 = vmatprep.subr.mxu0 0.0
    %450 = vmatpush1.msra.mxu0 0.0
    %451 = vmatprep.subr.mxu0 0.0
    %452 = vmatpush1.msra.mxu0 0.0
    %453 = vmatprep.subr.mxu0 0.0
    %454 = vmatpush1.msra.mxu0 0.0
    %455 = vmatprep.subr.mxu0 0.0
    %456 = vmatpush1.msra.mxu0 0.0
    %457 = vmatprep.subr.mxu0 0.0
    %458 = vmatpush1.msra.mxu0 0.0
    %459 = vmatprep.subr.mxu0 0.0
    %460 = vmatpush1.msra.mxu0 0.0
    %461 = vmatprep.subr.mxu0 0.0
    %462 = vmatpush1.msra.mxu0 0.0
    %463 = vmatprep.subr.mxu0 0.0
    %464 = vmatpush1.msra.mxu0 0.0
    %465 = vmatprep.subr.mxu0 0.0
    %466 = vmatpush1.msra.mxu0 0.0
    %467 = vmatprep.subr.mxu0 0.0
    %468 = vmatpush1.msra.mxu0 0.0
    %469 = vmatprep.subr.mxu0 0.0
    %470 = vmatpush1.msra.mxu0 0.0
    %471 = vmatprep.subr.mxu0 0.0
    %472 = vmatpush1.msra.mxu0 0.0
    %473 = vmatprep.subr.mxu0 0.0
    %474 = vmatpush1.msra.mxu0 0.0
    %475 = vmatprep.subr.mxu0 0.0
    %476 = vmatpush1.msra.mxu0 0.0
    %477 = vmatprep.subr.mxu0 0.0
    %478 = vmatpush1.msra.mxu0 0.0
    %479 = vmatprep.subr.mxu0 0.0
    %480 = vmatpush1.msra.mxu0 0.0
    %481 = vmatprep.subr.mxu0 0.0
    %482 = vmatpush1.msra.mxu0 0.0
    %483 = vmatprep.subr.mxu0 0.0
    %484 = vmatpush1.msra.mxu0 0.0
    %485 = vmatprep.subr.mxu0 0.0
    %486 = vmatpush1.msra.mxu0 0.0
    %487 = vmatprep.subr.mxu0 0.0
    %488 = vmatpush1.msra.mxu0 0.0
    %489 = vmatprep.subr.mxu0 0.0
    %490 = vmatpush1.msra.mxu0 0.0
    %491 = vmatprep.subr.mxu0 0.0
    %492 = vmatpush1.msra.mxu0 0.0
    %493 = vmatprep.subr.mxu0 0.0
    %494 = vmatpush1.msra.mxu0 0.0
    %495 = vmatprep.subr.mxu0 0.0
    %496 = vmatpush1.msra.mxu0 0.0
    %497 = vmatprep.subr.mxu0 0.0
    %498 = vmatpush1.msra.mxu0 0.0
    %499 = vmatprep.mubr.f32.mxu0 0.0
    %500 = vmatmul.mubr.f32.gmra.mrb[0].mxu0 %v430
    %v501 = vpop.f32.mrb[0].mxu0
    %v502 = vadd.f32 0.0, %v501
    %v503 = vpop.f32.mrb[0].mxu0
    %504 = vmatprep.mubr.f32.mxu0 0.0
    %505 = vmatmul.mubr.f32.gmra.mrb[0].mxu0 %v433
    %v506 = vpop.f32.mrb[0].mxu0
    %v507 = vadd.f32 0.0, %v506
    %v508 = vpop.f32.mrb[0].mxu0
    %509 = vdwg.mxu0
    %v510 = vadd.f32 %v260, %v502
    %v511 = vadd.f32 %v265, %v507
    %v512 = vtanh.pop %v510
    %v513 = vtanh.pop %v511
    %vm514 = vcmask 130048
    %v516 = vsel %vm514, %v260, 0
    %v519 = vsel %vm514, %v265, 0
    %v522 = vsel %vm514, %v425, 0
    %524 = vmatprep.subr.mxu0 0.0
    %525 = vmatpush1.xpose.msra.mxu0 %v522
    %526 = vmatprep.subr.mxu0 0.0
    %527 = vmatpush1.xpose.msra.mxu0 0.0
    %528 = vmatprep.subr.mxu0 0.0
    %529 = vmatpush1.xpose.msra.mxu0 0.0
    %530 = vmatprep.subr.mxu0 0.0
    %531 = vmatpush1.xpose.msra.mxu0 0.0
    %532 = vmatprep.subr.mxu0 0.0
    %533 = vmatpush1.xpose.msra.mxu0 0.0
    %534 = vmatprep.subr.mxu0 0.0
    %535 = vmatpush1.xpose.msra.mxu0 0.0
    %536 = vmatprep.subr.mxu0 0.0
    %537 = vmatpush1.xpose.msra.mxu0 0.0
    %538 = vmatprep.subr.mxu0 0.0
    %539 = vmatpush1.xpose.msra.mxu0 0.0
    %540 = vmatprep.subr.mxu0 0.0
    %541 = vmatpush1.xpose.msra.mxu0 0.0
    %542 = vmatprep.subr.mxu0 0.0
    %543 = vmatpush1.xpose.msra.mxu0 0.0
    %544 = vmatprep.subr.mxu0 0.0
    %545 = vmatpush1.xpose.msra.mxu0 0.0
    %546 = vmatprep.subr.mxu0 0.0
    %547 = vmatpush1.xpose.msra.mxu0 0.0
    %548 = vmatprep.subr.mxu0 0.0
    %549 = vmatpush1.xpose.msra.mxu0 0.0
    %550 = vmatprep.subr.mxu0 0.0
    %551 = vmatpush1.xpose.msra.mxu0 0.0
    %552 = vmatprep.subr.mxu0 0.0
    %553 = vmatpush1.xpose.msra.mxu0 0.0
    %554 = vmatprep.subr.mxu0 0.0
    %555 = vmatpush1.xpose.msra.mxu0 0.0
    %556 = vmatprep.subr.mxu0 0.0
    %557 = vmatpush1.xpose.msra.mxu0 0.0
    %558 = vmatprep.subr.mxu0 0.0
    %559 = vmatpush1.xpose.msra.mxu0 0.0
    %560 = vmatprep.subr.mxu0 0.0
    %561 = vmatpush1.xpose.msra.mxu0 0.0
    %562 = vmatprep.subr.mxu0 0.0
    %563 = vmatpush1.xpose.msra.mxu0 0.0
    %564 = vmatprep.subr.mxu0 0.0
    %565 = vmatpush1.xpose.msra.mxu0 0.0
    %566 = vmatprep.subr.mxu0 0.0
    %567 = vmatpush1.xpose.msra.mxu0 0.0
    %568 = vmatprep.subr.mxu0 0.0
    %569 = vmatpush1.xpose.msra.mxu0 0.0
    %570 = vmatprep.subr.mxu0 0.0
    %571 = vmatpush1.xpose.msra.mxu0 0.0
    %572 = vmatprep.subr.mxu0 0.0
    %573 = vmatpush1.xpose.msra.mxu0 0.0
    %574 = vmatprep.subr.mxu0 0.0
    %575 = vmatpush1.xpose.msra.mxu0 0.0
    %576 = vmatprep.subr.mxu0 0.0
    %577 = vmatpush1.xpose.msra.mxu0 0.0
    %578 = vmatprep.subr.mxu0 0.0
    %579 = vmatpush1.xpose.msra.mxu0 0.0
    %580 = vmatprep.subr.mxu0 0.0
    %581 = vmatpush1.xpose.msra.mxu0 0.0
    %582 = vmatprep.subr.mxu0 0.0
    %583 = vmatpush1.xpose.msra.mxu0 0.0
    %584 = vmatprep.subr.mxu0 0.0
    %585 = vmatpush1.xpose.msra.mxu0 0.0
    %586 = vmatprep.subr.mxu0 0.0
    %587 = vmatpush1.xpose.msra.mxu0 0.0
    %588 = vmatprep.mubr.f32.mxu0 0.0
    %589 = vmatmul.mubr.f32.gmra.mrb[0].mxu0 %v516
    %v590 = vpop.f32.mrb[0].mxu0
    %v591 = vadd.f32 0.0, %v590
    %v592 = vpop.f32.mrb[0].mxu0
    %593 = vmatprep.mubr.f32.mxu0 0.0
    %594 = vmatmul.mubr.f32.gmra.mrb[0].mxu0 %v519
    %v595 = vpop.f32.mrb[0].mxu0
    %v596 = vadd.f32 0.0, %v595
    %v597 = vpop.f32.mrb[0].mxu0
    %598 = vdwg.mxu0
    %v599 = vadd.f32 %v348, %v591
    %v600 = vadd.f32 %v353, %v596
    %v601 = vtanh.pop %v599
    %v602 = vtanh.pop %v600
    %604 = vset.pattern.permute.xlu0 0
    %605 = vperm.xlu0 %604, %v75
    %v606 = vpop.permute.xlu0 %605
    %609 = vset.pattern.permute.xlu0 0
    %610 = vperm.xlu0 %609, %v76
    %v611 = vpop.permute.xlu0 %610
    %v613 = vmul.f32 %v606, %v512
    %v614 = vmul.f32 %v611, %v513
    %v615 = vsel %vm514, %v613, 0.0
    %v616 = vsel %vm514, %v614, 0.0
    %v617 = vadd.f32 %v615, %v616
    %v618 = vrot.slane %v617, 4
    %v619 = vadd.f32 %v617, %v618
    %v620 = vrot.slane %v619, 2
    %v621 = vadd.f32 %v619, %v620
    %v622 = vrot.slane %v621, 1
    %v623 = vadd.f32 %v621, %v622
    %v624 = vsel %vm514, %v623, -inf
    %625 = vmax.xlane.f32.xlu0 %v624
    %v626 = vpop.xlane.xlu0 %625
    %v627 = vsub.f32 %v623, %v626
    %v628 = vmul.f32 %v627, 1.442695
    %v629 = vpow.pop %v628
    %v630 = vsel %vm514, %v629, 0.0
    %631 = vadd.xlane.f32.xlu0 %v630
    %v632 = vpop.xlane.xlu0 %631
    %v633 = vrcp.pop %v632
    %v634 = vmul.f32 %v632, %v633
    %v635 = vsub.f32 2.0, %v634
    %v636 = vmul.f32 %v633, %v635
    %v637 = vmul.f32 %v629, %v636
    %639 = vset.pattern.permute.xlu0 0
    %640 = vperm.xlu0 %639, %v77
    %v641 = vpop.permute.xlu0 %640
    %644 = vset.pattern.permute.xlu0 0
    %645 = vperm.xlu0 %644, %v78
    %v646 = vpop.permute.xlu0 %645
    %v648 = vmul.f32 %v641, %v601
    %v649 = vmul.f32 %v646, %v602
    %v650 = vsel %vm428, %v648, 0.0
    %v651 = vsel %vm428, %v649, 0.0
    %v652 = vadd.f32 %v650, %v651
    %v653 = vrot.slane %v652, 4
    %v654 = vadd.f32 %v652, %v653
    %v655 = vrot.slane %v654, 2
    %v656 = vadd.f32 %v654, %v655
    %v657 = vrot.slane %v656, 1
    %v658 = vadd.f32 %v656, %v657
    %v659 = vsel %vm428, %v658, -inf
    %660 = vmax.xlane.f32.xlu0 %v659
    %v661 = vpop.xlane.xlu0 %660
    %v662 = vsub.f32 %v658, %v661
    %v663 = vmul.f32 %v662, 1.442695
    %v664 = vpow.pop %v663
    %v665 = vsel %vm428, %v664, 0.0
    %666 = vadd.xlane.f32.xlu0 %v665
    %v667 = vpop.xlane.xlu0 %666
    %v668 = vrcp.pop %v667
    %v669 = vmul.f32 %v667, %v668
    %v670 = vsub.f32 2.0, %v669
    %v671 = vmul.f32 %v668, %v670
    %v672 = vmul.f32 %v664, %v671
    %v674 = vsel %vm514, %v637, 0
    %676 = vmatprep.subr.mxu0 0.0
    %677 = vmatpush1.msra.mxu0 %v79
    %678 = vmatprep.subr.mxu0 0.0
    %679 = vmatpush1.msra.mxu0 %v80
    %680 = vmatprep.subr.mxu0 0.0
    %681 = vmatpush1.msra.mxu0 0.0
    %682 = vmatprep.subr.mxu0 0.0
    %683 = vmatpush1.msra.mxu0 0.0
    %684 = vmatprep.subr.mxu0 0.0
    %685 = vmatpush1.msra.mxu0 0.0
    %686 = vmatprep.subr.mxu0 0.0
    %687 = vmatpush1.msra.mxu0 0.0
    %688 = vmatprep.subr.mxu0 0.0
    %689 = vmatpush1.msra.mxu0 0.0
    %690 = vmatprep.subr.mxu0 0.0
    %691 = vmatpush1.msra.mxu0 0.0
    %692 = vmatprep.subr.mxu0 0.0
    %693 = vmatpush1.msra.mxu0 0.0
    %694 = vmatprep.subr.mxu0 0.0
    %695 = vmatpush1.msra.mxu0 0.0
    %696 = vmatprep.subr.mxu0 0.0
    %697 = vmatpush1.msra.mxu0 0.0
    %698 = vmatprep.subr.mxu0 0.0
    %699 = vmatpush1.msra.mxu0 0.0
    %700 = vmatprep.subr.mxu0 0.0
    %701 = vmatpush1.msra.mxu0 0.0
    %702 = vmatprep.subr.mxu0 0.0
    %703 = vmatpush1.msra.mxu0 0.0
    %704 = vmatprep.subr.mxu0 0.0
    %705 = vmatpush1.msra.mxu0 0.0
    %706 = vmatprep.subr.mxu0 0.0
    %707 = vmatpush1.msra.mxu0 0.0
    %708 = vmatprep.subr.mxu0 0.0
    %709 = vmatpush1.msra.mxu0 0.0
    %710 = vmatprep.subr.mxu0 0.0
    %711 = vmatpush1.msra.mxu0 0.0
    %712 = vmatprep.subr.mxu0 0.0
    %713 = vmatpush1.msra.mxu0 0.0
    %714 = vmatprep.subr.mxu0 0.0
    %715 = vmatpush1.msra.mxu0 0.0
    %716 = vmatprep.subr.mxu0 0.0
    %717 = vmatpush1.msra.mxu0 0.0
    %718 = vmatprep.subr.mxu0 0.0
    %719 = vmatpush1.msra.mxu0 0.0
    %720 = vmatprep.subr.mxu0 0.0
    %721 = vmatpush1.msra.mxu0 0.0
    %722 = vmatprep.subr.mxu0 0.0
    %723 = vmatpush1.msra.mxu0 0.0
    %724 = vmatprep.subr.mxu0 0.0
    %725 = vmatpush1.msra.mxu0 0.0
    %726 = vmatprep.subr.mxu0 0.0
    %727 = vmatpush1.msra.mxu0 0.0
    %728 = vmatprep.subr.mxu0 0.0
    %729 = vmatpush1.msra.mxu0 0.0
    %730 = vmatprep.subr.mxu0 0.0
    %731 = vmatpush1.msra.mxu0 0.0
    %732 = vmatprep.subr.mxu0 0.0
    %733 = vmatpush1.msra.mxu0 0.0
    %734 = vmatprep.subr.mxu0 0.0
    %735 = vmatpush1.msra.mxu0 0.0
    %736 = vmatprep.subr.mxu0 0.0
    %737 = vmatpush1.msra.mxu0 0.0
    %738 = vmatprep.subr.mxu0 0.0
    %739 = vmatpush1.msra.mxu0 0.0
    %740 = vmatprep.mubr.f32.mxu0 0.0
    %741 = vmatmul.mubr.f32.gmra.mrb[0].mxu0 %v674
    %v742 = vpop.f32.mrb[0].mxu0
    %v743 = vadd.f32 0.0, %v742
    %v744 = vpop.f32.mrb[0].mxu0
    %745 = vdwg.mxu0
    %v747 = vsel %vm428, %v672, 0
    %749 = vmatprep.subr.mxu0 0.0
    %750 = vmatpush1.msra.mxu0 %v83
    %751 = vmatprep.subr.mxu0 0.0
    %752 = vmatpush1.msra.mxu0 0.0
    %753 = vmatprep.subr.mxu0 0.0
    %754 = vmatpush1.msra.mxu0 0.0
    %755 = vmatprep.subr.mxu0 0.0
    %756 = vmatpush1.msra.mxu0 0.0
    %757 = vmatprep.subr.mxu0 0.0
    %758 = vmatpush1.msra.mxu0 0.0
    %759 = vmatprep.subr.mxu0 0.0
    %760 = vmatpush1.msra.mxu0 0.0
    %761 = vmatprep.subr.mxu0 0.0
    %762 = vmatpush1.msra.mxu0 0.0
    %763 = vmatprep.subr.mxu0 0.0
    %764 = vmatpush1.msra.mxu0 0.0
    %765 = vmatprep.subr.mxu0 0.0
    %766 = vmatpush1.msra.mxu0 0.0
    %767 = vmatprep.subr.mxu0 0.0
    %768 = vmatpush1.msra.mxu0 0.0
    %769 = vmatprep.subr.mxu0 0.0
    %770 = vmatpush1.msra.mxu0 0.0
    %771 = vmatprep.subr.mxu0 0.0
    %772 = vmatpush1.msra.mxu0 0.0
    %773 = vmatprep.subr.mxu0 0.0
    %774 = vmatpush1.msra.mxu0 0.0
    %775 = vmatprep.subr.mxu0 0.0
    %776 = vmatpush1.msra.mxu0 0.0
    %777 = vmatprep.subr.mxu0 0.0
    %778 = vmatpush1.msra.mxu0 0.0
    %779 = vmatprep.subr.mxu0 0.0
    %780 = vmatpush1.msra.mxu0 0.0
    %781 = vmatprep.subr.mxu0 0.0
    %782 = vmatpush1.msra.mxu0 0.0
    %783 = vmatprep.subr.mxu0 0.0
    %784 = vmatpush1.msra.mxu0 0.0
    %785 = vmatprep.subr.mxu0 0.0
    %786 = vmatpush1.msra.mxu0 0.0
    %787 = vmatprep.subr.mxu0 0.0
    %788 = vmatpush1.msra.mxu0 0.0
    %789 = vmatprep.subr.mxu0 0.0
    %790 = vmatpush1.msra.mxu0 0.0
    %791 = vmatprep.subr.mxu0 0.0
    %792 = vmatpush1.msra.mxu0 0.0
    %793 = vmatprep.subr.mxu0 0.0
    %794 = vmatpush1.msra.mxu0 0.0
    %795 = vmatprep.subr.mxu0 0.0
    %796 = vmatpush1.msra.mxu0 0.0
    %797 = vmatprep.subr.mxu0 0.0
    %798 = vmatpush1.msra.mxu0 0.0
    %799 = vmatprep.subr.mxu0 0.0
    %800 = vmatpush1.msra.mxu0 0.0
    %801 = vmatprep.subr.mxu0 0.0
    %802 = vmatpush1.msra.mxu0 0.0
    %803 = vmatprep.subr.mxu0 0.0
    %804 = vmatpush1.msra.mxu0 0.0
    %805 = vmatprep.subr.mxu0 0.0
    %806 = vmatpush1.msra.mxu0 0.0
    %807 = vmatprep.subr.mxu0 0.0
    %808 = vmatpush1.msra.mxu0 0.0
    %809 = vmatprep.subr.mxu0 0.0
    %810 = vmatpush1.msra.mxu0 0.0
    %811 = vmatprep.subr.mxu0 0.0
    %812 = vmatpush1.msra.mxu0 0.0
    %813 = vmatprep.mubr.f32.mxu0 0.0
    %814 = vmatmul.mubr.f32.gmra.mrb[0].mxu0 %v747
    %v815 = vpop.f32.mrb[0].mxu0
    %v816 = vadd.f32 0.0, %v815
    %v817 = vpop.f32.mrb[0].mxu0
    %818 = vdwg.mxu0
    %vm819 = vcmask 122880
    %820 = vst.msk [vmem:[#allocation8] sm:$0x1] %vm819, %v637
    %821 = vrot.lane.b32.xlu0 %v672, 16
    %v822 = vpop.permute.xlu0 %821
    %vm824 = vcmask 188544
    %825 = vst.msk [vmem:[#allocation8] sm:$0x1] %vm824, %v822
    %827 = vrot.lane.b32.xlu0 %v743, 24
    %v828 = vpop.permute.xlu0 %827
    %vm830 = vcmask 450752
    %831 = vst.msk [vmem:[#allocation8] sm:$0x1] %vm830, %v828
    %833 = vrot.lane.b32.xlu0 %v816, 56
    %v834 = vpop.permute.xlu0 %833
    %vm836 = vcmask 647616
    %837 = vst.msk [vmem:[#allocation8] sm:$0x1] %vm836, %v834
    %841 = vrot.lane.b32.xlu0 %v174, 112
    %v842 = vpop.permute.xlu0 %841
    %843 = vrot.lane.b32.xlu0 %v179, 112
    %v844 = vpop.permute.xlu0 %843
    %845 = vrot.lane.b32.xlu0 %v184, 112
    %v846 = vpop.permute.xlu0 %845
    %850 = vmatprep.subr.mxu0 0.0
    %851 = vmatpush1.msra.mxu0 %v842
    %852 = vmatprep.subr.mxu0 0.0
    %853 = vmatpush1.msra.mxu0 %v844
    %854 = vmatprep.subr.mxu0 0.0
    %855 = vmatpush1.msra.mxu0 %v846
    %856 = vmatprep.subr.mxu0 0.0
    %857 = vmatpush1.msra.mxu0 0.0
    %858 = vmatprep.subr.mxu0 0.0
    %859 = vmatpush1.msra.mxu0 0.0
    %860 = vmatprep.subr.mxu0 0.0
    %861 = vmatpush1.msra.mxu0 0.0
    %862 = vmatprep.subr.mxu0 0.0
    %863 = vmatpush1.msra.mxu0 0.0
    %864 = vmatprep.subr.mxu0 0.0
    %865 = vmatpush1.msra.mxu0 0.0
    %866 = vmatprep.subr.mxu0 0.0
    %867 = vmatpush1.msra.mxu0 0.0
    %868 = vmatprep.subr.mxu0 0.0
    %869 = vmatpush1.msra.mxu0 0.0
    %870 = vmatprep.subr.mxu0 0.0
    %871 = vmatpush1.msra.mxu0 0.0
    %872 = vmatprep.subr.mxu0 0.0
    %873 = vmatpush1.msra.mxu0 0.0
    %874 = vmatprep.subr.mxu0 0.0
    %875 = vmatpush1.msra.mxu0 0.0
    %876 = vmatprep.subr.mxu0 0.0
    %877 = vmatpush1.msra.mxu0 0.0
    %878 = vmatprep.subr.mxu0 0.0
    %879 = vmatpush1.msra.mxu0 0.0
    %880 = vmatprep.subr.mxu0 0.0
    %881 = vmatpush1.msra.mxu0 0.0
    %882 = vmatprep.subr.mxu0 0.0
    %883 = vmatpush1.msra.mxu0 0.0
    %884 = vmatprep.subr.mxu0 0.0
    %885 = vmatpush1.msra.mxu0 0.0
    %886 = vmatprep.subr.mxu0 0.0
    %887 = vmatpush1.msra.mxu0 0.0
    %888 = vmatprep.subr.mxu0 0.0
    %889 = vmatpush1.msra.mxu0 0.0
    %890 = vmatprep.subr.mxu0 0.0
    %891 = vmatpush1.msra.mxu0 0.0
    %892 = vmatprep.subr.mxu0 0.0
    %893 = vmatpush1.msra.mxu0 0.0
    %894 = vmatprep.subr.mxu0 0.0
    %895 = vmatpush1.msra.mxu0 0.0
    %896 = vmatprep.subr.mxu0 0.0
    %897 = vmatpush1.msra.mxu0 0.0
    %898 = vmatprep.subr.mxu0 0.0
    %899 = vmatpush1.msra.mxu0 0.0
    %900 = vmatprep.subr.mxu0 0.0
    %901 = vmatpush1.msra.mxu0 0.0
    %902 = vmatprep.subr.mxu0 0.0
    %903 = vmatpush1.msra.mxu0 0.0
    %904 = vmatprep.subr.mxu0 0.0
    %905 = vmatpush1.msra.mxu0 0.0
    %906 = vmatprep.subr.mxu0 0.0
    %907 = vmatpush1.msra.mxu0 0.0
    %908 = vmatprep.subr.mxu0 0.0
    %909 = vmatpush1.msra.mxu0 0.0
    %910 = vmatprep.subr.mxu0 0.0
    %911 = vmatpush1.msra.mxu0 0.0
    %912 = vmatprep.subr.mxu0 0.0
    %913 = vmatpush1.msra.mxu0 0.0
    %914 = vmatprep.mubr.f32.mxu0 0.0
    %915 = vmatmul.mubr.f32.gmra.mrb[0].mxu0 %v279
    %v916 = vpop.f32.mrb[0].mxu0
    %v917 = vadd.f32 0.0, %v916
    %v918 = vpop.f32.mrb[0].mxu0
    %919 = vdwg.mxu0
    %920 = vrot.lane.b32.xlu0 %v348, 120
    %v921 = vpop.permute.xlu0 %920
    %922 = vrot.lane.b32.xlu0 %v353, 120
    %v923 = vpop.permute.xlu0 %922
    %v924 = vsel %vm428, %v921, 0
    %v926 = vsel %vm428, %v923, 0
    %928 = vmatprep.subr.mxu0 0.0
    %929 = vmatpush1.msra.mxu0 %v917
    %930 = vmatprep.subr.mxu0 0.0
    %931 = vmatpush1.msra.mxu0 0.0
    %932 = vmatprep.subr.mxu0 0.0
    %933 = vmatpush1.msra.mxu0 0.0
    %934 = vmatprep.subr.mxu0 0.0
    %935 = vmatpush1.msra.mxu0 0.0
    %936 = vmatprep.subr.mxu0 0.0
    %937 = vmatpush1.msra.mxu0 0.0
    %938 = vmatprep.subr.mxu0 0.0
    %939 = vmatpush1.msra.mxu0 0.0
    %940 = vmatprep.subr.mxu0 0.0
    %941 = vmatpush1.msra.mxu0 0.0
    %942 = vmatprep.subr.mxu0 0.0
    %943 = vmatpush1.msra.mxu0 0.0
    %944 = vmatprep.subr.mxu0 0.0
    %945 = vmatpush1.msra.mxu0 0.0
    %946 = vmatprep.subr.mxu0 0.0
    %947 = vmatpush1.msra.mxu0 0.0
    %948 = vmatprep.subr.mxu0 0.0
    %949 = vmatpush1.msra.mxu0 0.0
    %950 = vmatprep.subr.mxu0 0.0
    %951 = vmatpush1.msra.mxu0 0.0
    %952 = vmatprep.subr.mxu0 0.0
    %953 = vmatpush1.msra.mxu0 0.0
    %954 = vmatprep.subr.mxu0 0.0
    %955 = vmatpush1.msra.mxu0 0.0
    %956 = vmatprep.subr.mxu0 0.0
    %957 = vmatpush1.msra.mxu0 0.0
    %958 = vmatprep.subr.mxu0 0.0
    %959 = vmatpush1.msra.mxu0 0.0
    %960 = vmatprep.subr.mxu0 0.0
    %961 = vmatpush1.msra.mxu0 0.0
    %962 = vmatprep.subr.mxu0 0.0
    %963 = vmatpush1.msra.mxu0 0.0
    %964 = vmatprep.subr.mxu0 0.0
    %965 = vmatpush1.msra.mxu0 0.0
    %966 = vmatprep.subr.mxu0 0.0
    %967 = vmatpush1.msra.mxu0 0.0
    %968 = vmatprep.subr.mxu0 0.0
    %969 = vmatpush1.msra.mxu0 0.0
    %970 = vmatprep.subr.mxu0 0.0
    %971 = vmatpush1.msra.mxu0 0.0
    %972 = vmatprep.subr.mxu0 0.0
    %973 = vmatpush1.msra.mxu0 0.0
    %974 = vmatprep.subr.mxu0 0.0
    %975 = vmatpush1.msra.mxu0 0.0
    %976 = vmatprep.subr.mxu0 0.0
    %977 = vmatpush1.msra.mxu0 0.0
    %978 = vmatprep.subr.mxu0 0.0
    %979 = vmatpush1.msra.mxu0 0.0
    %980 = vmatprep.subr.mxu0 0.0
    %981 = vmatpush1.msra.mxu0 0.0
    %982 = vmatprep.subr.mxu0 0.0
    %983 = vmatpush1.msra.mxu0 0.0
    %984 = vmatprep.subr.mxu0 0.0
    %985 = vmatpush1.msra.mxu0 0.0
    %986 = vmatprep.subr.mxu0 0.0
    %987 = vmatpush1.msra.mxu0 0.0
    %988 = vmatprep.subr.mxu0 0.0
    %989 = vmatpush1.msra.mxu0 0.0
    %990 = vmatprep.subr.mxu0 0.0
    %991 = vmatpush1.msra.mxu0 0.0
    %992 = vmatprep.mubr.f32.mxu0 0.0
    %993 = vmatmul.mubr.f32.gmra.mrb[0].mxu0 %v924
    %v994 = vpop.f32.mrb[0].mxu0
    %v995 = vadd.f32 0.0, %v994
    %v996 = vpop.f32.mrb[0].mxu0
    %997 = vmatprep.mubr.f32.mxu0 0.0
    %998 = vmatmul.mubr.f32.gmra.mrb[0].mxu0 %v926
    %v999 = vpop.f32.mrb[0].mxu0
    %v1000 = vadd.f32 0.0, %v999
    %v1001 = vpop.f32.mrb[0].mxu0
    %1002 = vdwg.mxu0
    %1005 = vrot.lane.b32.xlu0 %v995, 16
    %v1006 = vpop.permute.xlu0 %1005
    %1007 = vrot.lane.b32.xlu0 %v1000, 16
    %v1008 = vpop.permute.xlu0 %1007
    %v1011 = vadd.f32 %v260, %v1006
    %v1012 = vadd.f32 %v265, %v1008
    %v1013 = vtanh.pop %v1011
    %v1014 = vtanh.pop %v1012
    %1015 = vrot.lane.b32.xlu0 %v260, 112
    %v1016 = vpop.permute.xlu0 %1015
    %1017 = vrot.lane.b32.xlu0 %v265, 112
    %v1018 = vpop.permute.xlu0 %1017
    %v1019 = vsel %vm514, %v1016, 0
    %v1021 = vsel %vm514, %v1018, 0
    %v1024 = vsel %vm514, %v917, 0
    %1026 = vmatprep.subr.mxu0 0.0
    %1027 = vmatpush1.xpose.msra.mxu0 %v1024
    %1028 = vmatprep.subr.mxu0 0.0
    %1029 = vmatpush1.xpose.msra.mxu0 0.0
    %1030 = vmatprep.subr.mxu0 0.0
    %1031 = vmatpush1.xpose.msra.mxu0 0.0
    %1032 = vmatprep.subr.mxu0 0.0
    %1033 = vmatpush1.xpose.msra.mxu0 0.0
    %1034 = vmatprep.subr.mxu0 0.0
    %1035 = vmatpush1.xpose.msra.mxu0 0.0
    %1036 = vmatprep.subr.mxu0 0.0
    %1037 = vmatpush1.xpose.msra.mxu0 0.0
    %1038 = vmatprep.subr.mxu0 0.0
    %1039 = vmatpush1.xpose.msra.mxu0 0.0
    %1040 = vmatprep.subr.mxu0 0.0
    %1041 = vmatpush1.xpose.msra.mxu0 0.0
    %1042 = vmatprep.subr.mxu0 0.0
    %1043 = vmatpush1.xpose.msra.mxu0 0.0
    %1044 = vmatprep.subr.mxu0 0.0
    %1045 = vmatpush1.xpose.msra.mxu0 0.0
    %1046 = vmatprep.subr.mxu0 0.0
    %1047 = vmatpush1.xpose.msra.mxu0 0.0
    %1048 = vmatprep.subr.mxu0 0.0
    %1049 = vmatpush1.xpose.msra.mxu0 0.0
    %1050 = vmatprep.subr.mxu0 0.0
    %1051 = vmatpush1.xpose.msra.mxu0 0.0
    %1052 = vmatprep.subr.mxu0 0.0
    %1053 = vmatpush1.xpose.msra.mxu0 0.0
    %1054 = vmatprep.subr.mxu0 0.0
    %1055 = vmatpush1.xpose.msra.mxu0 0.0
    %1056 = vmatprep.subr.mxu0 0.0
    %1057 = vmatpush1.xpose.msra.mxu0 0.0
    %1058 = vmatprep.subr.mxu0 0.0
    %1059 = vmatpush1.xpose.msra.mxu0 0.0
    %1060 = vmatprep.subr.mxu0 0.0
    %1061 = vmatpush1.xpose.msra.mxu0 0.0
    %1062 = vmatprep.subr.mxu0 0.0
    %1063 = vmatpush1.xpose.msra.mxu0 0.0
    %1064 = vmatprep.subr.mxu0 0.0
    %1065 = vmatpush1.xpose.msra.mxu0 0.0
    %1066 = vmatprep.subr.mxu0 0.0
    %1067 = vmatpush1.xpose.msra.mxu0 0.0
    %1068 = vmatprep.subr.mxu0 0.0
    %1069 = vmatpush1.xpose.msra.mxu0 0.0
    %1070 = vmatprep.subr.mxu0 0.0
    %1071 = vmatpush1.xpose.msra.mxu0 0.0
    %1072 = vmatprep.subr.mxu0 0.0
    %1073 = vmatpush1.xpose.msra.mxu0 0.0
    %1074 = vmatprep.subr.mxu0 0.0
    %1075 = vmatpush1.xpose.msra.mxu0 0.0
    %1076 = vmatprep.subr.mxu0 0.0
    %1077 = vmatpush1.xpose.msra.mxu0 0.0
    %1078 = vmatprep.subr.mxu0 0.0
    %1079 = vmatpush1.xpose.msra.mxu0 0.0
    %1080 = vmatprep.subr.mxu0 0.0
    %1081 = vmatpush1.xpose.msra.mxu0 0.0
    %1082 = vmatprep.subr.mxu0 0.0
    %1083 = vmatpush1.xpose.msra.mxu0 0.0
    %1084 = vmatprep.subr.mxu0 0.0
    %1085 = vmatpush1.xpose.msra.mxu0 0.0
    %1086 = vmatprep.subr.mxu0 0.0
    %1087 = vmatpush1.xpose.msra.mxu0 0.0
    %1088 = vmatprep.subr.mxu0 0.0
    %1089 = vmatpush1.xpose.msra.mxu0 0.0
    %1090 = vmatprep.mubr.f32.mxu0 0.0
    %1091 = vmatmul.mubr.f32.gmra.mrb[0].mxu0 %v1019
    %v1092 = vpop.f32.mrb[0].mxu0
    %v1093 = vadd.f32 0.0, %v1092
    %v1094 = vpop.f32.mrb[0].mxu0
    %1095 = vmatprep.mubr.f32.mxu0 0.0
    %1096 = vmatmul.mubr.f32.gmra.mrb[0].mxu0 %v1021
    %v1097 = vpop.f32.mrb[0].mxu0
    %v1098 = vadd.f32 0.0, %v1097
    %v1099 = vpop.f32.mrb[0].mxu0
    %1100 = vdwg.mxu0
    %1103 = vrot.lane.b32.xlu0 %v1093, 8
    %v1104 = vpop.permute.xlu0 %1103
    %1105 = vrot.lane.b32.xlu0 %v1098, 8
    %v1106 = vpop.permute.xlu0 %1105
    %v1109 = vadd.f32 %v348, %v1104
    %v1110 = vadd.f32 %v353, %v1106
    %v1111 = vtanh.pop %v1109
    %v1112 = vtanh.pop %v1110
    %v1113 = vmul.f32 %v606, %v1013
    %v1114 = vmul.f32 %v611, %v1014
    %vm1115 = vcmask 261248
    %v1116 = vsel %vm1115, %v1113, 0.0
    %v1117 = vsel %vm1115, %v1114, 0.0
    %v1118 = vadd.f32 %v1116, %v1117
    %v1119 = vrot.slane %v1118, 4
    %v1120 = vadd.f32 %v1118, %v1119
    %v1121 = vrot.slane %v1120, 2
    %v1122 = vadd.f32 %v1120, %v1121
    %v1123 = vrot.slane %v1122, 1
    %v1124 = vadd.f32 %v1122, %v1123
    %v1125 = vsel %vm1115, %v1124, -inf
    %1126 = vmax.xlane.f32.xlu0 %v1125
    %v1127 = vpop.xlane.xlu0 %1126
    %v1128 = vsub.f32 %v1124, %v1127
    %v1129 = vmul.f32 %v1128, 1.442695
    %v1130 = vpow.pop %v1129
    %1132 = vrot.lane.b32.xlu0 %v1130, 112
    %v1133 = vpop.permute.xlu0 %1132
    %v1135 = vsel %vm514, %v1133, 0.0
    %1136 = vadd.xlane.f32.xlu0 %v1135
    %v1137 = vpop.xlane.xlu0 %1136
    %v1138 = vrcp.pop %v1137
    %v1139 = vmul.f32 %v1137, %v1138
    %v1140 = vsub.f32 2.0, %v1139
    %v1141 = vmul.f32 %v1138, %v1140
    %v1142 = vmul.f32 %v1130, %v1141
    %v1143 = vmul.f32 %v641, %v1111
    %v1144 = vmul.f32 %v646, %v1112
    %vm1145 = vcmask 130112
    %v1146 = vsel %vm1145, %v1143, 0.0
    %v1147 = vsel %vm1145, %v1144, 0.0
    %v1148 = vadd.f32 %v1146, %v1147
    %v1149 = vrot.slane %v1148, 4
    %v1150 = vadd.f32 %v1148, %v1149
    %v1151 = vrot.slane %v1150, 2
    %v1152 = vadd.f32 %v1150, %v1151
    %v1153 = vrot.slane %v1152, 1
    %v1154 = vadd.f32 %v1152, %v1153
    %v1155 = vsel %vm1145, %v1154, -inf
    %1156 = vmax.xlane.f32.xlu0 %v1155
    %v1157 = vpop.xlane.xlu0 %1156
    %v1158 = vsub.f32 %v1154, %v1157
    %v1159 = vmul.f32 %v1158, 1.442695
    %v1160 = vpow.pop %v1159
    %1162 = vrot.lane.b32.xlu0 %v1160, 120
    %v1163 = vpop.permute.xlu0 %1162
    %v1165 = vsel %vm428, %v1163, 0.0
    %1166 = vadd.xlane.f32.xlu0 %v1165
    %v1167 = vpop.xlane.xlu0 %1166
    %v1168 = vrcp.pop %v1167
    %v1169 = vmul.f32 %v1167, %v1168
    %v1170 = vsub.f32 2.0, %v1169
    %v1171 = vmul.f32 %v1168, %v1170
    %v1172 = vmul.f32 %v1160, %v1171
    %1174 = vrot.lane.b32.xlu0 %v1142, 112
    %v1175 = vpop.permute.xlu0 %1174
    %v1176 = vsel %vm514, %v1175, 0
    %1178 = vmatprep.subr.mxu0 0.0
    %1179 = vmatpush1.msra.mxu0 %v81
    %1180 = vmatprep.subr.mxu0 0.0
    %1181 = vmatpush1.msra.mxu0 %v82
    %1182 = vmatprep.subr.mxu0 0.0
    %1183 = vmatpush1.msra.mxu0 0.0
    %1184 = vmatprep.subr.mxu0 0.0
    %1185 = vmatpush1.msra.mxu0 0.0
    %1186 = vmatprep.subr.mxu0 0.0
    %1187 = vmatpush1.msra.mxu0 0.0
    %1188 = vmatprep.subr.mxu0 0.0
    %1189 = vmatpush1.msra.mxu0 0.0
    %1190 = vmatprep.subr.mxu0 0.0
    %1191 = vmatpush1.msra.mxu0 0.0
    %1192 = vmatprep.subr.mxu0 0.0
    %1193 = vmatpush1.msra.mxu0 0.0
    %1194 = vmatprep.subr.mxu0 0.0
    %1195 = vmatpush1.msra.mxu0 0.0
    %1196 = vmatprep.subr.mxu0 0.0
    %1197 = vmatpush1.msra.mxu0 0.0
    %1198 = vmatprep.subr.mxu0 0.0
    %1199 = vmatpush1.msra.mxu0 0.0
    %1200 = vmatprep.subr.mxu0 0.0
    %1201 = vmatpush1.msra.mxu0 0.0
    %1202 = vmatprep.subr.mxu0 0.0
    %1203 = vmatpush1.msra.mxu0 0.0
    %1204 = vmatprep.subr.mxu0 0.0
    %1205 = vmatpush1.msra.mxu0 0.0
    %1206 = vmatprep.subr.mxu0 0.0
    %1207 = vmatpush1.msra.mxu0 0.0
    %1208 = vmatprep.subr.mxu0 0.0
    %1209 = vmatpush1.msra.mxu0 0.0
    %1210 = vmatprep.subr.mxu0 0.0
    %1211 = vmatpush1.msra.mxu0 0.0
    %1212 = vmatprep.subr.mxu0 0.0
    %1213 = vmatpush1.msra.mxu0 0.0
    %1214 = vmatprep.subr.mxu0 0.0
    %1215 = vmatpush1.msra.mxu0 0.0
    %1216 = vmatprep.subr.mxu0 0.0
    %1217 = vmatpush1.msra.mxu0 0.0
    %1218 = vmatprep.subr.mxu0 0.0
    %1219 = vmatpush1.msra.mxu0 0.0
    %1220 = vmatprep.subr.mxu0 0.0
    %1221 = vmatpush1.msra.mxu0 0.0
    %1222 = vmatprep.subr.mxu0 0.0
    %1223 = vmatpush1.msra.mxu0 0.0
    %1224 = vmatprep.subr.mxu0 0.0
    %1225 = vmatpush1.msra.mxu0 0.0
    %1226 = vmatprep.subr.mxu0 0.0
    %1227 = vmatpush1.msra.mxu0 0.0
    %1228 = vmatprep.subr.mxu0 0.0
    %1229 = vmatpush1.msra.mxu0 0.0
    %1230 = vmatprep.subr.mxu0 0.0
    %1231 = vmatpush1.msra.mxu0 0.0
    %1232 = vmatprep.subr.mxu0 0.0
    %1233 = vmatpush1.msra.mxu0 0.0
    %1234 = vmatprep.subr.mxu0 0.0
    %1235 = vmatpush1.msra.mxu0 0.0
    %1236 = vmatprep.subr.mxu0 0.0
    %1237 = vmatpush1.msra.mxu0 0.0
    %1238 = vmatprep.subr.mxu0 0.0
    %1239 = vmatpush1.msra.mxu0 0.0
    %1240 = vmatprep.subr.mxu0 0.0
    %1241 = vmatpush1.msra.mxu0 0.0
    %1242 = vmatprep.mubr.f32.mxu0 0.0
    %1243 = vmatmul.mubr.f32.gmra.mrb[0].mxu0 %v1176
    %v1244 = vpop.f32.mrb[0].mxu0
    %v1245 = vadd.f32 0.0, %v1244
    %v1246 = vpop.f32.mrb[0].mxu0
    %1247 = vdwg.mxu0
    %1249 = vrot.lane.b32.xlu0 %v1172, 120
    %v1250 = vpop.permute.xlu0 %1249
    %v1251 = vsel %vm428, %v1250, 0
    %1253 = vmatprep.subr.mxu0 0.0
    %1254 = vmatpush1.msra.mxu0 %v84
    %1255 = vmatprep.subr.mxu0 0.0
    %1256 = vmatpush1.msra.mxu0 0.0
    %1257 = vmatprep.subr.mxu0 0.0
    %1258 = vmatpush1.msra.mxu0 0.0
    %1259 = vmatprep.subr.mxu0 0.0
    %1260 = vmatpush1.msra.mxu0 0.0
    %1261 = vmatprep.subr.mxu0 0.0
    %1262 = vmatpush1.msra.mxu0 0.0
    %1263 = vmatprep.subr.mxu0 0.0
    %1264 = vmatpush1.msra.mxu0 0.0
    %1265 = vmatprep.subr.mxu0 0.0
    %1266 = vmatpush1.msra.mxu0 0.0
    %1267 = vmatprep.subr.mxu0 0.0
    %1268 = vmatpush1.msra.mxu0 0.0
    %1269 = vmatprep.subr.mxu0 0.0
    %1270 = vmatpush1.msra.mxu0 0.0
    %1271 = vmatprep.subr.mxu0 0.0
    %1272 = vmatpush1.msra.mxu0 0.0
    %1273 = vmatprep.subr.mxu0 0.0
    %1274 = vmatpush1.msra.mxu0 0.0
    %1275 = vmatprep.subr.mxu0 0.0
    %1276 = vmatpush1.msra.mxu0 0.0
    %1277 = vmatprep.subr.mxu0 0.0
    %1278 = vmatpush1.msra.mxu0 0.0
    %1279 = vmatprep.subr.mxu0 0.0
    %1280 = vmatpush1.msra.mxu0 0.0
    %1281 = vmatprep.subr.mxu0 0.0
    %1282 = vmatpush1.msra.mxu0 0.0
    %1283 = vmatprep.subr.mxu0 0.0
    %1284 = vmatpush1.msra.mxu0 0.0
    %1285 = vmatprep.subr.mxu0 0.0
    %1286 = vmatpush1.msra.mxu0 0.0
    %1287 = vmatprep.subr.mxu0 0.0
    %1288 = vmatpush1.msra.mxu0 0.0
    %1289 = vmatprep.subr.mxu0 0.0
    %1290 = vmatpush1.msra.mxu0 0.0
    %1291 = vmatprep.subr.mxu0 0.0
    %1292 = vmatpush1.msra.mxu0 0.0
    %1293 = vmatprep.subr.mxu0 0.0
    %1294 = vmatpush1.msra.mxu0 0.0
    %1295 = vmatprep.subr.mxu0 0.0
    %1296 = vmatpush1.msra.mxu0 0.0
    %1297 = vmatprep.subr.mxu0 0.0
    %1298 = vmatpush1.msra.mxu0 0.0
    %1299 = vmatprep.subr.mxu0 0.0
    %1300 = vmatpush1.msra.mxu0 0.0
    %1301 = vmatprep.subr.mxu0 0.0
    %1302 = vmatpush1.msra.mxu0 0.0
    %1303 = vmatprep.subr.mxu0 0.0
    %1304 = vmatpush1.msra.mxu0 0.0
    %1305 = vmatprep.subr.mxu0 0.0
    %1306 = vmatpush1.msra.mxu0 0.0
    %1307 = vmatprep.subr.mxu0 0.0
    %1308 = vmatpush1.msra.mxu0 0.0
    %1309 = vmatprep.subr.mxu0 0.0
    %1310 = vmatpush1.msra.mxu0 0.0
    %1311 = vmatprep.subr.mxu0 0.0
    %1312 = vmatpush1.msra.mxu0 0.0
    %1313 = vmatprep.subr.mxu0 0.0
    %1314 = vmatpush1.msra.mxu0 0.0
    %1315 = vmatprep.subr.mxu0 0.0
    %1316 = vmatpush1.msra.mxu0 0.0
    %1317 = vmatprep.mubr.f32.mxu0 0.0
    %1318 = vmatmul.mubr.f32.gmra.mrb[0].mxu0 %v1251
    %v1319 = vpop.f32.mrb[0].mxu0
    %v1320 = vadd.f32 0.0, %v1319
    %v1321 = vpop.f32.mrb[0].mxu0
    %1322 = vdwg.mxu0
    %1324 = vst.msk [vmem:[#allocation8 + $0x1] sm:$0x1] %vm819, %v1175
    %1325 = vrot.lane.b32.xlu0 %v1172, 8
    %v1326 = vpop.permute.xlu0 %1325
    %1328 = vst.msk [vmem:[#allocation8 + $0x1] sm:$0x1] %vm824, %v1326
    %1330 = vrot.lane.b32.xlu0 %v1245, 24
    %v1331 = vpop.permute.xlu0 %1330
    %1333 = vst.msk [vmem:[#allocation8 + $0x1] sm:$0x1] %vm830, %v1331
    %1335 = vrot.lane.b32.xlu0 %v1320, 56
    %v1336 = vpop.permute.xlu0 %1335
    %1338 = vst.msk [vmem:[#allocation8 + $0x1] sm:$0x1] %vm836, %v1336
    // Predicated region
    $region42: #{tpu_custom_call.1} parent=1 // pred_check
      _
    $region43: #{tpu_custom_call.1} parent=1 // pred_check_branch
      %1340 = sbr.rel (0) target = $region45
    $region44: #{tpu_custom_call.1} parent=1 // pred_region
      %s1342 = ssub.s32 32, 32
      %1343 = vsyncadd [#allocation4], %s1342
      %s1345 = sshll.u32 [#allocation8], 4
      %s1346 = int_to_ptr.vmem [resolvable:$true] %s1345
      %1348 = dma.vmem_to_hbm [thread:$0]  %s1346, 32, %s7, [#allocation4]
    $region45: #{tpu_custom_call.1} parent=1 // pred_fallthru
      _
    // Predicated region
    $region46: #{tpu_custom_call.1} parent=1 // pred_check
      _
    $region47: #{tpu_custom_call.1} parent=1 // pred_check_branch
      %1350 = sbr.rel (0) target = $region49
    $region48: #{tpu_custom_call.1} parent=1 // pred_region
      %1351 = dma.done [#allocation4], 32
    $region49: #{tpu_custom_call.1} parent=1 // pred_fallthru
      _
    %1352 = vsyncpa [#allocation3], 1
    %1353 = vsyncpa [#allocation6], 1
    %1354 = vsyncpa [#allocation4], 1

</llo_original>
